<compile_context>
chip_gen: v7x
topology: tpu7x:2x2x1
jax: 0.10.0
libtpu: 0.0.40
codegen_flags: <defaults>
</compile_context>

<pallas_src>
import math
import functools

import jax
import jax.numpy as jnp
from jax.experimental import pallas as pl
from jax.experimental.pallas import tpu as pltpu


# ---------------------------------------------------------------------------
# Pass 1: fused Q/K/V projection -> head-major (B, H, S, d_head) in compute_dtype.
# ---------------------------------------------------------------------------
def _qkv_proj_kernel(q_ref, k_ref, v_ref,
                     wq_ref, bq_ref, wk_ref, bk_ref, wv_ref, bv_ref,
                     qh_ref, kh_ref, vh_ref,
                     *, h_count, d_head, compute_dtype):
    # q/k/v_ref : (1, TILE_S, D)            activations (f32)
    # w*_ref    : (D, D)                    pre-transposed, pre-cast to compute_dtype
    # b*_ref    : (1, D)                    f32
    # *h_ref    : (1, H, TILE_S, d_head)    head-major projections (compute_dtype)
    inv_sqrt_dh = 1.0 / math.sqrt(d_head)

    def project(x_ref, w_ref, b_ref, scale=None):
        x = x_ref[0].astype(compute_dtype)
        y = jnp.dot(x, w_ref[...], preferred_element_type=jnp.float32) + b_ref[...]
        if scale is not None:
            y = y * scale
        t = y.shape[0]
        # (TILE_S, D) -> (H, TILE_S, d_head): one relayout per token (amortized; it no
        # longer runs inside the attention (qi, ki) loop).
        return y.reshape(t, h_count, d_head).transpose(1, 0, 2).astype(compute_dtype)

    # Fold the 1/sqrt(d_head) attention scale into Q at projection time.
    qh_ref[0] = project(q_ref, wq_ref, bq_ref, scale=inv_sqrt_dh)
    kh_ref[0] = project(k_ref, wk_ref, bk_ref)
    vh_ref[0] = project(v_ref, wv_ref, bv_ref)


# ---------------------------------------------------------------------------
# Pass 2: flash-style attention (online softmax) + output projection.
# ---------------------------------------------------------------------------
def _flash_attn_kernel(qh_ref, kh_ref, vh_ref, wo_ref, bo_ref,
                       o_ref,
                       m_scratch, l_scratch, acc_scratch,
                       *, d_model, compute_dtype):
    # qh_ref       : (1, H, TILE_Q, d_head)   pre-projected & pre-scaled Q
    # kh/vh_ref    : (1, H, TILE_K, d_head)   pre-projected K / V
    # wo_ref       : (D, D) compute_dtype ;  bo_ref : (1, D) f32
    # o_ref        : (1, TILE_Q, D)
    # m/l_scratch  : (H, TILE_Q, 1) f32  (lane dim pads to 128; acceptable at tile<=256)
    # acc_scratch  : (H, TILE_Q, d_head) f32
    ki = pl.program_id(2)
    nk = pl.num_programs(2)

    @pl.when(ki == 0)
    def _init():
        m_scratch[...] = jnp.full(m_scratch.shape, -jnp.inf, dtype=m_scratch.dtype)
        l_scratch[...] = jnp.zeros(l_scratch.shape, dtype=l_scratch.dtype)
        acc_scratch[...] = jnp.zeros(acc_scratch.shape, dtype=acc_scratch.dtype)

    qh = qh_ref[0]                                              # (H, TILE_Q, d_head)
    kh = kh_ref[0]                                              # (H, TILE_K, d_head)
    vh = vh_ref[0]                                              # (H, TILE_K, d_head)

    # All-head scores in one batched MXU matmul; contraction on d_head (no transpose).
    s = jnp.einsum("hqd,hkd->hqk", qh, kh,
                   preferred_element_type=jnp.float32)          # (H, TILE_Q, TILE_K)
    # TODO(synk): optional attention mask would be applied to `s` here (mask=None path).

    # Online softmax update (all stats in f32; v5e-safe — no bf16 VPU/EUP math).
    m_prev = m_scratch[...]
    m_new = jnp.maximum(m_prev, s.max(axis=-1, keepdims=True))
    alpha = jnp.exp(m_prev - m_new)
    p = jnp.exp(s - m_new)
    l_scratch[...] = alpha * l_scratch[...] + p.sum(axis=-1, keepdims=True)
    acc_scratch[...] = alpha * acc_scratch[...] + jnp.einsum(
        "hqk,hkd->hqd", p.astype(compute_dtype), vh,
        preferred_element_type=jnp.float32)
    m_scratch[...] = m_new

    @pl.when(ki == nk - 1)
    def _finalize():
        # Normalize (EUP approx reciprocal), merge heads (once per q-tile), project out.
        ctx = acc_scratch[...] * pl.reciprocal(l_scratch[...], approx=True)
        tq = ctx.shape[1]
        ctx2d = ctx.transpose(1, 0, 2).reshape(tq, d_model)     # (TILE_Q, D)
        out = jnp.dot(ctx2d.astype(compute_dtype), wo_ref[...],
                      preferred_element_type=jnp.float32) + bo_ref[...]
        o_ref[0] = out.astype(o_ref.dtype)


# ---------------------------------------------------------------------------
# Generation-aware budgets / tiling.
# ---------------------------------------------------------------------------
def _tpu_budget():
    """Returns (vmem_limit_bytes, max_tile) based on the TPU generation."""
    vmem_bytes = 64 * 1024 * 1024            # conservative default (v7x per-TensorCore)
    try:
        info = pltpu.get_tpu_info()
        vmem_bytes = int(getattr(info, "vmem_capacity_bytes", vmem_bytes))
    except Exception:
        pass
    if vmem_bytes <= 64 * 1024 * 1024:       # v7x: 64 MiB physical VMEM per TC
        return 48 * 1024 * 1024, 256
    # v5e / v6e: 128 MiB physical — use most of it and allow 512-wide tiles.
    return min(100 * 1024 * 1024, int(vmem_bytes * 0.8)), 512


def _pick_tile(s, max_tile):
    """Largest power-of-two tile <= max_tile that evenly divides s; else full s."""
    t = max_tile
    while t >= 8:
        if s >= t and s % t == 0:
            return t
        t //= 2
    return s


def _const_block_spec(block_shape, index_map):
    """Spec for grid-invariant blocks (weights/biases): single-buffer when supported."""
    try:
        return pl.BlockSpec(block_shape, index_map, pipeline_mode=pl.Buffered(1))
    except TypeError:  # older BlockSpec without pipeline_mode support
        return pl.BlockSpec(block_shape, index_map)


# ---------------------------------------------------------------------------
# Wrapper.
# ---------------------------------------------------------------------------
def multi_head_attention(q, k, v, params, *, h_count,
                         compute_dtype=jnp.bfloat16,
                         tile_q=None, tile_k=None, tile_s=None):
    """q, k, v: (B, S, D) float32.  params: pre-transposed weights + biases."""
    B, S, D = q.shape
    assert D % h_count == 0
    d_head = D // h_count

    vmem_limit, max_tile = _tpu_budget()
    tile_s = tile_s or _pick_tile(S, max_tile)
    tile_q = tile_q or _pick_tile(S, max_tile)
    tile_k = tile_k or _pick_tile(S, max_tile)
    n_s, n_q, n_k = S // tile_s, S // tile_q, S // tile_k

    # Pre-cast weights once in the wrapper: no per-grid-step VPU casts, and half the
    # weight DMA / VMEM residency when compute_dtype=bf16.  Biases stay f32 (they are
    # added to the f32 matmul accumulator).
    wq = params["wq_t"].astype(compute_dtype)
    wk = params["wk_t"].astype(compute_dtype)
    wv = params["wv_t"].astype(compute_dtype)
    wo = params["wo_t"].astype(compute_dtype)
    bq, bk, bv, bo = params["bq"], params["bk"], params["bv"], params["bo"]

    cp_proj = pltpu.CompilerParams(
        dimension_semantics=("parallel", "parallel"),
        vmem_limit_bytes=vmem_limit)
    cp_flash = pltpu.CompilerParams(
        dimension_semantics=("parallel", "parallel", "arbitrary"),
        vmem_limit_bytes=vmem_limit)

    # ---- Pass 1: Q/K/V projection -> (B, H, S, d_head) in compute_dtype ----
    x_spec = pl.BlockSpec((1, tile_s, D), lambda b, si: (b, si, 0))
    w_spec = _const_block_spec((D, D), lambda b, si: (0, 0))
    b_spec = _const_block_spec((1, D), lambda b, si: (0, 0))
    h_out_spec = pl.BlockSpec((1, h_count, tile_s, d_head), lambda b, si: (b, 0, si, 0))

    proj_kernel = functools.partial(_qkv_proj_kernel, h_count=h_count,
                                    d_head=d_head, compute_dtype=compute_dtype)
    head_shape = jax.ShapeDtypeStruct((B, h_count, S, d_head), compute_dtype)
    qh, kh, vh = pl.pallas_call(
        proj_kernel,
        out_shape=(head_shape, head_shape, head_shape),
        grid_spec=pltpu.PrefetchScalarGridSpec(
            num_scalar_prefetch=0,
            grid=(B, n_s),
            in_specs=[x_spec, x_spec, x_spec,
                      w_spec, b_spec,    # W_q
                      w_spec, b_spec,    # W_k
                      w_spec, b_spec],   # W_v
            out_specs=[h_out_spec, h_out_spec, h_out_spec]),
        compiler_params=cp_proj,
    )(q, k, v, wq, bq, wk, bk, wv, bv)

    # ---- Pass 2: flash attention + output projection ----
    qh_spec = pl.BlockSpec((1, h_count, tile_q, d_head), lambda b, qi, ki: (b, 0, qi, 0))
    kv_spec = pl.BlockSpec((1, h_count, tile_k, d_head), lambda b, qi, ki: (b, 0, ki, 0))
    wo_spec = _const_block_spec((D, D), lambda b, qi, ki: (0, 0))
    bo_spec = _const_block_spec((1, D), lambda b, qi, ki: (0, 0))
    o_spec = pl.BlockSpec((1, tile_q, D), lambda b, qi, ki: (b, qi, 0))

    flash_kernel = functools.partial(_flash_attn_kernel, d_model=D,
                                     compute_dtype=compute_dtype)
    return pl.pallas_call(
        flash_kernel,
        out_shape=jax.ShapeDtypeStruct((B, S, D), q.dtype),
        grid_spec=pltpu.PrefetchScalarGridSpec(
            num_scalar_prefetch=0,
            grid=(B, n_q, n_k),
            in_specs=[qh_spec, kv_spec, kv_spec, wo_spec, bo_spec],
            out_specs=o_spec,
            scratch_shapes=[
                pltpu.VMEM((h_count, tile_q, 1), jnp.float32),       # running max
                pltpu.VMEM((h_count, tile_q, 1), jnp.float32),       # running sum
                pltpu.VMEM((h_count, tile_q, d_head), jnp.float32),  # running context
            ]),
        compiler_params=cp_flash,
    )(qh, kh, vh, wo, bo)


# ---------------------------------------------------------------------------
# Reference + test harness.
# ---------------------------------------------------------------------------
def _reference(q, k, v, params, *, h_count):
    """Plain-JAX reference mirroring the PyTorch forward (mask=None, no dropout)."""
    B, S, D = q.shape
    d_head = D // h_count

    def lin(x, wt, b):
        return x @ wt + b

    Q = lin(q, params["wq_t"], params["bq"])
    K = lin(k, params["wk_t"], params["bk"])
    V = lin(v, params["wv_t"], params["bv"])

    def split(X):  # (B,S,D) -> (B,H,S,dh)
        return X.reshape(B, S, h_count, d_head).transpose(0, 2, 1, 3)

    Qh, Kh, Vh = split(Q), split(K), split(V)
    scores = jnp.einsum("bhqd,bhkd->bhqk", Qh, Kh) / math.sqrt(d_head)
    p = jax.nn.softmax(scores, axis=-1)
    ctx = jnp.einsum("bhqk,bhkd->bhqd", p, Vh)
    ctx = ctx.transpose(0, 2, 1, 3).reshape(B, S, D)
    return lin(ctx, params["wo_t"], params["bo"])


def _init_params(key, d_model):
    """Deterministic PyTorch-Linear-style init; weights stored pre-transposed (in,out)."""
    bound = 1.0 / math.sqrt(d_model)
    keys = jax.random.split(key, 8)

    def w(kk):  # (in, out) = W.T
        return jax.random.uniform(kk, (d_model, d_model), jnp.float32, -bound, bound)

    def b(kk):
        return jax.random.uniform(kk, (1, d_model), jnp.float32, -bound, bound)

    return {
        "wq_t": w(keys[0]), "bq": b(keys[1]),
        "wk_t": w(keys[2]), "bk": b(keys[3]),
        "wv_t": w(keys[4]), "bv": b(keys[5]),
        "wo_t": w(keys[6]), "bo": b(keys[7]),
    }


if __name__ == "__main__":
    B, S, D, H = 2, 8, 32, 4   # batch, seq, d_model, heads  (d_head = 8)

    key = jax.random.PRNGKey(0)
    kq, kk, kv, kp = jax.random.split(key, 4)
    q = jax.random.normal(kq, (B, S, D), jnp.float32)
    k = jax.random.normal(kk, (B, S, D), jnp.float32)
    v = jax.random.normal(kv, (B, S, D), jnp.float32)
    params = _init_params(kp, D)

    ref = _reference(q, k, v, params, h_count=H)

    # f32 compute path (only deviations vs. reference: approx reciprocal, online softmax).
    out_f32 = jax.block_until_ready(
        multi_head_attention(q, k, v, params, h_count=H, compute_dtype=jnp.float32))
    assert out_f32.shape == (B, S, D)
    assert jnp.allclose(out_f32, ref, atol=1e-2, rtol=1e-2), "f32 kernel mismatch vs reference"

    # bf16 fast path (bf16 MXU inputs, f32 accumulation, f32 softmax stats).
    out_bf16 = jax.block_until_ready(
        multi_head_attention(q, k, v, params, h_count=H, compute_dtype=jnp.bfloat16))
    assert out_bf16.shape == (B, S, D)
    assert jnp.allclose(out_bf16, ref, atol=5e-2, rtol=5e-2), "bf16 kernel mismatch vs reference"

    print("KERNEL_OK")
</pallas_src>

<mosaic_0001>
module attributes {stable_mosaic.version = 11 : i64} {
  func.func @_qkv_proj_kernel(%arg0: i32, %arg1: i32, %arg2: memref<1x8x32xf32, #tpu.memory_space<vmem>>, %arg3: memref<1x8x32xf32, #tpu.memory_space<vmem>>, %arg4: memref<1x8x32xf32, #tpu.memory_space<vmem>>, %arg5: memref<32x32xf32, #tpu.memory_space<vmem>>, %arg6: memref<1x32xf32, #tpu.memory_space<vmem>>, %arg7: memref<32x32xf32, #tpu.memory_space<vmem>>, %arg8: memref<1x32xf32, #tpu.memory_space<vmem>>, %arg9: memref<32x32xf32, #tpu.memory_space<vmem>>, %arg10: memref<1x32xf32, #tpu.memory_space<vmem>>, %arg11: memref<1x4x8x8xf32, #tpu.memory_space<vmem>>, %arg12: memref<1x4x8x8xf32, #tpu.memory_space<vmem>>, %arg13: memref<1x4x8x8xf32, #tpu.memory_space<vmem>>) attributes {dimension_semantics = [#tpu.dimension_semantics<parallel>, #tpu.dimension_semantics<parallel>], iteration_bounds = array<i64: 2, 1>, scalar_prefetch = 0 : i64, scratch_operands = 0 : i64, tpu.core_type = #tpu.core_type<tc>, window_params = [{transform_indices = @transform_0, window_bounds = array<i64: 1, 8, 32>}, {transform_indices = @transform_1, window_bounds = array<i64: 1, 8, 32>}, {transform_indices = @transform_2, window_bounds = array<i64: 1, 8, 32>}, {pipeline_mode = #tpu.pipeline_mode<synchronous>, transform_indices = @transform_3, window_bounds = array<i64: 32, 32>}, {pipeline_mode = #tpu.pipeline_mode<synchronous>, transform_indices = @transform_4, window_bounds = array<i64: 1, 32>}, {pipeline_mode = #tpu.pipeline_mode<synchronous>, transform_indices = @transform_5, window_bounds = array<i64: 32, 32>}, {pipeline_mode = #tpu.pipeline_mode<synchronous>, transform_indices = @transform_6, window_bounds = array<i64: 1, 32>}, {pipeline_mode = #tpu.pipeline_mode<synchronous>, transform_indices = @transform_7, window_bounds = array<i64: 32, 32>}, {pipeline_mode = #tpu.pipeline_mode<synchronous>, transform_indices = @transform_8, window_bounds = array<i64: 1, 32>}, {transform_indices = @transform_9, window_bounds = array<i64: 1, 4, 8, 8>}, {transform_indices = @transform_10, window_bounds = array<i64: 1, 4, 8, 8>}, {transform_indices = @transform_11, window_bounds = array<i64: 1, 4, 8, 8>}]} {
    %c0 = arith.constant 0 : index
    %c0_0 = arith.constant 0 : index
    %c0_1 = arith.constant 0 : index
    %0 = vector.load %arg2[%c0, %c0_0, %c0_1] : memref<1x8x32xf32, #tpu.memory_space<vmem>>, vector<1x8x32xf32>
    %1 = vector.shape_cast %0 : vector<1x8x32xf32> to vector<8x32xf32>
    %c0_2 = arith.constant 0 : index
    %c0_3 = arith.constant 0 : index
    %2 = vector.load %arg5[%c0_2, %c0_3] : memref<32x32xf32, #tpu.memory_space<vmem>>, vector<32x32xf32>
    %cst = arith.constant dense<0.000000e+00> : vector<8x32xf32>
    %3 = tpu.matmul %1, %2, %cst {dimension_numbers = #tpu.dot_dimension_numbers<[1], [0], [0], [1], [0, 0, 1, 1], [], []>} : vector<8x32xf32>, vector<32x32xf32>, vector<8x32xf32> -> vector<8x32xf32>
    %c0_4 = arith.constant 0 : index
    %c0_5 = arith.constant 0 : index
    %4 = vector.load %arg6[%c0_4, %c0_5] : memref<1x32xf32, #tpu.memory_space<vmem>>, vector<1x32xf32>
    %5 = vector.broadcast %4 : vector<1x32xf32> to vector<8x32xf32>
    %6 = arith.addf %3, %5 : vector<8x32xf32>
    %cst_6 = arith.constant 0.353553385 : f32
    %7 = vector.broadcast %cst_6 : f32 to vector<8x32xf32>
    %8 = arith.mulf %6, %7 : vector<8x32xf32>
    %9 = vector.shape_cast %8 : vector<8x32xf32> to vector<8x4x8xf32>
    %10 = tpu.transpose %9, [1, 0, 2] : vector<8x4x8xf32> -> vector<4x8x8xf32>
    %c0_7 = arith.constant 0 : index
    %c0_8 = arith.constant 0 : index
    %c0_9 = arith.constant 0 : index
    %c0_10 = arith.constant 0 : index
    %11 = vector.load %arg11[%c0_7, %c0_8, %c0_9, %c0_10] : memref<1x4x8x8xf32, #tpu.memory_space<vmem>>, vector<1x4x8x8xf32>
    %12 = vector.shape_cast %11 : vector<1x4x8x8xf32> to vector<4x8x8xf32>
    %13 = vector.shape_cast %10 : vector<4x8x8xf32> to vector<1x4x8x8xf32>
    tpu.vector_store %arg11[%c0_7, %c0_8, %c0_9, %c0_10], %13 {strides = array<i32>} : memref<1x4x8x8xf32, #tpu.memory_space<vmem>>, vector<1x4x8x8xf32>,
    %c0_11 = arith.constant 0 : index
    %c0_12 = arith.constant 0 : index
    %c0_13 = arith.constant 0 : index
    %14 = vector.load %arg3[%c0_11, %c0_12, %c0_13] : memref<1x8x32xf32, #tpu.memory_space<vmem>>, vector<1x8x32xf32>
    %15 = vector.shape_cast %14 : vector<1x8x32xf32> to vector<8x32xf32>
    %c0_14 = arith.constant 0 : index
    %c0_15 = arith.constant 0 : index
    %16 = vector.load %arg7[%c0_14, %c0_15] : memref<32x32xf32, #tpu.memory_space<vmem>>, vector<32x32xf32>
    %cst_16 = arith.constant dense<0.000000e+00> : vector<8x32xf32>
    %17 = tpu.matmul %15, %16, %cst_16 {dimension_numbers = #tpu.dot_dimension_numbers<[1], [0], [0], [1], [0, 0, 1, 1], [], []>} : vector<8x32xf32>, vector<32x32xf32>, vector<8x32xf32> -> vector<8x32xf32>
    %c0_17 = arith.constant 0 : index
    %c0_18 = arith.constant 0 : index
    %18 = vector.load %arg8[%c0_17, %c0_18] : memref<1x32xf32, #tpu.memory_space<vmem>>, vector<1x32xf32>
    %19 = vector.broadcast %18 : vector<1x32xf32> to vector<8x32xf32>
    %20 = arith.addf %17, %19 : vector<8x32xf32>
    %21 = vector.shape_cast %20 : vector<8x32xf32> to vector<8x4x8xf32>
    %22 = tpu.transpose %21, [1, 0, 2] : vector<8x4x8xf32> -> vector<4x8x8xf32>
    %c0_19 = arith.constant 0 : index
    %c0_20 = arith.constant 0 : index
    %c0_21 = arith.constant 0 : index
    %c0_22 = arith.constant 0 : index
    %23 = vector.load %arg12[%c0_19, %c0_20, %c0_21, %c0_22] : memref<1x4x8x8xf32, #tpu.memory_space<vmem>>, vector<1x4x8x8xf32>
    %24 = vector.shape_cast %23 : vector<1x4x8x8xf32> to vector<4x8x8xf32>
    %25 = vector.shape_cast %22 : vector<4x8x8xf32> to vector<1x4x8x8xf32>
    tpu.vector_store %arg12[%c0_19, %c0_20, %c0_21, %c0_22], %25 {strides = array<i32>} : memref<1x4x8x8xf32, #tpu.memory_space<vmem>>, vector<1x4x8x8xf32>,
    %c0_23 = arith.constant 0 : index
    %c0_24 = arith.constant 0 : index
    %c0_25 = arith.constant 0 : index
    %26 = vector.load %arg4[%c0_23, %c0_24, %c0_25] : memref<1x8x32xf32, #tpu.memory_space<vmem>>, vector<1x8x32xf32>
    %27 = vector.shape_cast %26 : vector<1x8x32xf32> to vector<8x32xf32>
    %c0_26 = arith.constant 0 : index
    %c0_27 = arith.constant 0 : index
    %28 = vector.load %arg9[%c0_26, %c0_27] : memref<32x32xf32, #tpu.memory_space<vmem>>, vector<32x32xf32>
    %cst_28 = arith.constant dense<0.000000e+00> : vector<8x32xf32>
    %29 = tpu.matmul %27, %28, %cst_28 {dimension_numbers = #tpu.dot_dimension_numbers<[1], [0], [0], [1], [0, 0, 1, 1], [], []>} : vector<8x32xf32>, vector<32x32xf32>, vector<8x32xf32> -> vector<8x32xf32>
    %c0_29 = arith.constant 0 : index
    %c0_30 = arith.constant 0 : index
    %30 = vector.load %arg10[%c0_29, %c0_30] : memref<1x32xf32, #tpu.memory_space<vmem>>, vector<1x32xf32>
    %31 = vector.broadcast %30 : vector<1x32xf32> to vector<8x32xf32>
    %32 = arith.addf %29, %31 : vector<8x32xf32>
    %33 = vector.shape_cast %32 : vector<8x32xf32> to vector<8x4x8xf32>
    %34 = tpu.transpose %33, [1, 0, 2] : vector<8x4x8xf32> -> vector<4x8x8xf32>
    %c0_31 = arith.constant 0 : index
    %c0_32 = arith.constant 0 : index
    %c0_33 = arith.constant 0 : index
    %c0_34 = arith.constant 0 : index
    %35 = vector.load %arg13[%c0_31, %c0_32, %c0_33, %c0_34] : memref<1x4x8x8xf32, #tpu.memory_space<vmem>>, vector<1x4x8x8xf32>
    %36 = vector.shape_cast %35 : vector<1x4x8x8xf32> to vector<4x8x8xf32>
    %37 = vector.shape_cast %34 : vector<4x8x8xf32> to vector<1x4x8x8xf32>
    tpu.vector_store %arg13[%c0_31, %c0_32, %c0_33, %c0_34], %37 {strides = array<i32>} : memref<1x4x8x8xf32, #tpu.memory_space<vmem>>, vector<1x4x8x8xf32>,
    return
  }
  func.func @transform_0(%arg0: i32, %arg1: i32) -> (i32, i32, i32) {
    %c0_i32 = arith.constant 0 : i32
    %c0_i32_0 = arith.constant 0 : i32
    return %arg0, %arg1, %c0_i32 : i32, i32, i32
  }
  func.func @transform_1(%arg0: i32, %arg1: i32) -> (i32, i32, i32) {
    %c0_i32 = arith.constant 0 : i32
    %c0_i32_0 = arith.constant 0 : i32
    return %arg0, %arg1, %c0_i32 : i32, i32, i32
  }
  func.func @transform_2(%arg0: i32, %arg1: i32) -> (i32, i32, i32) {
    %c0_i32 = arith.constant 0 : i32
    %c0_i32_0 = arith.constant 0 : i32
    return %arg0, %arg1, %c0_i32 : i32, i32, i32
  }
  func.func @transform_3(%arg0: i32, %arg1: i32) -> (i32, i32) {
    %c0_i32 = arith.constant 0 : i32
    %c0_i32_0 = arith.constant 0 : i32
    %c0_i32_1 = arith.constant 0 : i32
    return %c0_i32, %c0_i32_0 : i32, i32
  }
  func.func @transform_4(%arg0: i32, %arg1: i32) -> (i32, i32) {
    %c0_i32 = arith.constant 0 : i32
    %c0_i32_0 = arith.constant 0 : i32
    %c0_i32_1 = arith.constant 0 : i32
    return %c0_i32, %c0_i32_0 : i32, i32
  }
  func.func @transform_5(%arg0: i32, %arg1: i32) -> (i32, i32) {
    %c0_i32 = arith.constant 0 : i32
    %c0_i32_0 = arith.constant 0 : i32
    %c0_i32_1 = arith.constant 0 : i32
    return %c0_i32, %c0_i32_0 : i32, i32
  }
  func.func @transform_6(%arg0: i32, %arg1: i32) -> (i32, i32) {
    %c0_i32 = arith.constant 0 : i32
    %c0_i32_0 = arith.constant 0 : i32
    %c0_i32_1 = arith.constant 0 : i32
    return %c0_i32, %c0_i32_0 : i32, i32
  }
  func.func @transform_7(%arg0: i32, %arg1: i32) -> (i32, i32) {
    %c0_i32 = arith.constant 0 : i32
    %c0_i32_0 = arith.constant 0 : i32
    %c0_i32_1 = arith.constant 0 : i32
    return %c0_i32, %c0_i32_0 : i32, i32
  }
  func.func @transform_8(%arg0: i32, %arg1: i32) -> (i32, i32) {
    %c0_i32 = arith.constant 0 : i32
    %c0_i32_0 = arith.constant 0 : i32
    %c0_i32_1 = arith.constant 0 : i32
    return %c0_i32, %c0_i32_0 : i32, i32
  }
  func.func @transform_9(%arg0: i32, %arg1: i32) -> (i32, i32, i32, i32) {
    %c0_i32 = arith.constant 0 : i32
    %c0_i32_0 = arith.constant 0 : i32
    %c0_i32_1 = arith.constant 0 : i32
    return %arg0, %c0_i32, %arg1, %c0_i32_0 : i32, i32, i32, i32
  }
  func.func @transform_10(%arg0: i32, %arg1: i32) -> (i32, i32, i32, i32) {
    %c0_i32 = arith.constant 0 : i32
    %c0_i32_0 = arith.constant 0 : i32
    %c0_i32_1 = arith.constant 0 : i32
    return %arg0, %c0_i32, %arg1, %c0_i32_0 : i32, i32, i32, i32
  }
  func.func @transform_11(%arg0: i32, %arg1: i32) -> (i32, i32, i32, i32) {
    %c0_i32 = arith.constant 0 : i32
    %c0_i32_0 = arith.constant 0 : i32
    %c0_i32_1 = arith.constant 0 : i32
    return %arg0, %c0_i32, %arg1, %c0_i32_0 : i32, i32, i32, i32
  }
}

</mosaic_0001>

<llo_original>
// kernel: tpu_custom_call.1
$region0: #{tpu_custom_call.1}
  #allocation0 [shape = 'u32[]', space=smem, size = 0x4, offset = 0x4, fixed_abs, tag = 'smem constant byte address 0x4 - core index']
  #allocation1 [shape = 'u32[144,128]{1,0:T(1,128)}', space=vmem, size = 0x12000, scoped, tag = 'internal scratch']
  %s0 = inlined_call_operand.hbm [shape: f32[2,8,32], index: 0, kind: input, shape index: {}]
  %s1 = inlined_call_operand.hbm [shape: f32[2,8,32], index: 1, kind: input, shape index: {}]
  %s2 = inlined_call_operand.hbm [shape: f32[2,8,32], index: 2, kind: input, shape index: {}]
  %s3 = inlined_call_operand.hbm [shape: f32[32,32], index: 3, kind: input, shape index: {}]
  %s4 = inlined_call_operand.vmem [shape: f32[1,32], index: 4, kind: input, shape index: {}]
  %s5 = inlined_call_operand.hbm [shape: f32[32,32], index: 5, kind: input, shape index: {}]
  %s6 = inlined_call_operand.vmem [shape: f32[1,32], index: 6, kind: input, shape index: {}]
  %s7 = inlined_call_operand.hbm [shape: f32[32,32], index: 7, kind: input, shape index: {}]
  %s8 = inlined_call_operand.vmem [shape: f32[1,32], index: 8, kind: input, shape index: {}]
  %s9 = inlined_call_operand.hbm [shape: f32[2,4,8,8], index: 9, kind: output, shape index: {0}]
  %s10 = inlined_call_operand.hbm [shape: f32[2,4,8,8], index: 10, kind: output, shape index: {1}]
  %s11 = inlined_call_operand.hbm [shape: f32[2,4,8,8], index: 11, kind: output, shape index: {2}]
  %12 = xla_tuple %s9, %s10, %s11
  %s13 = sld [smem:[#allocation0]]
  $region109: #{tpu_custom_call.1} parent=0
    _
  %s15 = ssub.s32 1, %s13
  %s16 = scalar_select 0, %s15, %s13
  $region1: #{tpu_custom_call.1} parent=0
    #allocation2 [shape = 'u8[8192]{0}', space=vmem, size = 0x2000, scoped, tag = 'input window, operand 0']
    #allocation3 [shape = 's32[2]{0}', space=sflag, size = 0x8, scoped, tag = 'scoped memory for tpu_custom_call.1']
    #allocation4 [shape = 's32[2]{0}', space=sflag, size = 0x8, scoped, tag = 'scoped memory for tpu_custom_call.1']
    #allocation5 [shape = 'u8[8192]{0}', space=vmem, size = 0x2000, scoped, tag = 'input window, operand 1']
    #allocation6 [shape = 's32[2]{0}', space=sflag, size = 0x8, scoped, tag = 'scoped memory for tpu_custom_call.1']
    #allocation7 [shape = 'u8[8192]{0}', space=vmem, size = 0x2000, scoped, tag = 'input window, operand 2']
    #allocation8 [shape = 'u8[16384]{0}', space=vmem, size = 0x4000, scoped, tag = 'input window, operand 3, single buffered']
    #allocation9 [shape = 's32[1]{0}', space=sflag, size = 0x4, scoped, tag = 'scoped memory for tpu_custom_call.1']
    #allocation10 [shape = 'u8[16384]{0}', space=vmem, size = 0x4000, scoped, tag = 'input window, operand 5, single buffered']
    #allocation11 [shape = 'u8[16384]{0}', space=vmem, size = 0x4000, scoped, tag = 'input window, operand 7, single buffered']
    #allocation12 [shape = 's32[1]{0}', space=sflag, size = 0x4, scoped, tag = 'scoped memory for tpu_custom_call.1']
    #allocation13 [shape = 'u8[32768]{0}', space=vmem, size = 0x8000, scoped, tag = 'output window, operand 0']
    #allocation14 [shape = 'u8[32768]{0}', space=vmem, size = 0x8000, scoped, tag = 'output window, operand 1']
    #allocation15 [shape = 's32[2]{0}', space=sflag, size = 0x8, scoped, tag = 'scoped memory for tpu_custom_call.1']
    #allocation16 [shape = 'u8[32768]{0}', space=vmem, size = 0x8000, scoped, tag = 'output window, operand 2']
    %17 = vsyncpa [#allocation3], 0
    %s18 = scalar_lea.sflag [#allocation3], 1
    %19 = vsyncpa %s18, 0
    %20 = vsyncpa [#allocation6], 0
    %s21 = scalar_lea.sflag [#allocation6], 1
    %22 = vsyncpa %s21, 0
    %23 = vsyncpa [#allocation9], 0
    %24 = vsyncpa [#allocation12], 0
    %25 = vsyncpa [#allocation4], 0
    %s26 = scalar_lea.sflag [#allocation4], 1
    %27 = vsyncpa %s26, 0
    %28 = vsyncpa [#allocation15], 0
    %s29 = scalar_lea.sflag [#allocation15], 1
    %30 = vsyncpa %s29, 0
    loop: start=0, step=1, limit=4
    $region2: #{tpu_custom_call.1} parent=1 // loop_pre_header
      _
    $region3: #{tpu_custom_call.1} parent=1 // loop_header
      %s32 = sphi 0, %s36
      %p33 = scmp.ge.s32.totalorder %s32, 4
      %s39 = sphi 0, %s51
      %s40 = sphi 0, %s47
      %s41 = sphi 0, %s39
      %s42 = sphi 0, %s40
      %s43 = sphi 0, %s41
      %s44 = sphi 0, %s42
      %s56 = sphi 0, %s58
      %s59 = sphi 0, %s56
      %s60 = sphi 0, %s59
      %s76 = sphi 0, %s60
      %s84 = sphi 0, %s86
      %s87 = sphi 0, %s84
      %s88 = sphi 0, %s87
      %s104 = sphi 0, %s88
      %s112 = sphi 0, %s114
      %s115 = sphi 0, %s112
      %s116 = sphi 0, %s115
      %s132 = sphi 0, %s116
      %s136 = sphi 0, %s136
      %s138 = sphi 0, %s136
      %s139 = sphi 0, %s138
      %s153 = sphi 0, %s139
      %s157 = sphi 0, %s157
      %s159 = sphi 0, %s157
      %s160 = sphi 0, %s159
      %s174 = sphi 0, %s160
      %s178 = sphi 0, %s178
      %s180 = sphi 0, %s178
      %s181 = sphi 0, %s180
      %s195 = sphi 0, %s181
      %s199 = sphi 0, %s199
      %s201 = sphi 0, %s199
      %s202 = sphi 0, %s201
      %s216 = sphi 0, %s202
      %s220 = sphi 0, %s220
      %s222 = sphi 0, %s220
      %s223 = sphi 0, %s222
      %s237 = sphi 0, %s223
      %s241 = sphi 0, %s241
      %s243 = sphi 0, %s241
      %s244 = sphi 0, %s243
      %s258 = sphi 0, %s244
      %s266 = sphi 0, %s268
      %s269 = sphi 0, %s266
      %s270 = sphi 0, %s269
      %s286 = sphi 0, %s270
      %s294 = sphi 0, %s296
      %s297 = sphi 0, %s294
      %s298 = sphi 0, %s297
      %s314 = sphi 0, %s298
      %s322 = sphi 0, %s324
      %s325 = sphi 0, %s322
      %s326 = sphi 0, %s325
      %s342 = sphi 0, %s326
    $region4: #{tpu_custom_call.1} parent=1 // loop_header_branch
      %35 = sbr.rel (%p33) target = $region8
    $region5: #{tpu_custom_call.1} parent=1 // loop_body
      %s37 = ssub.s32 %s32, 1
      %s38 = ssub.s32 %s32, 2
      %s45 = sadd.s32 1, %s40
      %p46 = scmp.ge.s32.totalorder %s45, 1
      %s47 = scalar_select %p46, 0, %s45
      %s48 = sadd.s32 1, %s39
      %s49 = scalar_select %p46, %s48, %s39
      %p50 = scmp.ge.s32.totalorder %s49, 2
      %s51 = scalar_select %p50, 0, %s49
      %s52 = ssub.s32 %s39, %s51
      %s53 = ssub.s32 %s40, %s47
      %s54 = sor.u32 %s52, %s53
      %p55 = scmp.eq.s32.totalorder %s54, 0
      %s57 = sadd.s32 %s56, 1
      %s58 = scalar_select %p55, %s56, %s57
      %p61 = pneg %p55
      %p62 = scmp.eq.s32.totalorder %s32, 1
      %p63 = por %p61, %p62
      %p64 = scmp.ne.s32.totalorder %s56, %s59
      %p65 = scmp.eq.s32.totalorder %s32, 0
      %p66 = por %p64, %p65
      %p67 = scmp.ne.s32.totalorder %s56, %s59
      %p68 = scmp.eq.s32.totalorder %s37, 1
      %p69 = por %p67, %p68
      %p70 = scmp.ne.s32.totalorder %s59, %s60
      %p71 = scmp.eq.s32.totalorder %s37, 0
      %p72 = por %p70, %p71
      %p73 = scmp.ne.s32.totalorder %s59, %s60
      %p74 = scmp.eq.s32.totalorder %s38, 1
      %p75 = por %p73, %p74
      %p77 = scmp.ne.s32.totalorder %s60, %s76
      %p78 = scmp.eq.s32.totalorder %s38, 0
      %p79 = por %p77, %p78
      %s80 = ssub.s32 %s39, %s51
      %s81 = ssub.s32 %s40, %s47
      %s82 = sor.u32 %s80, %s81
      %p83 = scmp.eq.s32.totalorder %s82, 0
      %s85 = sadd.s32 %s84, 1
      %s86 = scalar_select %p83, %s84, %s85
      %p89 = pneg %p83
      %p90 = scmp.eq.s32.totalorder %s32, 1
      %p91 = por %p89, %p90
      %p92 = scmp.ne.s32.totalorder %s84, %s87
      %p93 = scmp.eq.s32.totalorder %s32, 0
      %p94 = por %p92, %p93
      %p95 = scmp.ne.s32.totalorder %s84, %s87
      %p96 = scmp.eq.s32.totalorder %s37, 1
      %p97 = por %p95, %p96
      %p98 = scmp.ne.s32.totalorder %s87, %s88
      %p99 = scmp.eq.s32.totalorder %s37, 0
      %p100 = por %p98, %p99
      %p101 = scmp.ne.s32.totalorder %s87, %s88
      %p102 = scmp.eq.s32.totalorder %s38, 1
      %p103 = por %p101, %p102
      %p105 = scmp.ne.s32.totalorder %s88, %s104
      %p106 = scmp.eq.s32.totalorder %s38, 0
      %p107 = por %p105, %p106
      %s108 = ssub.s32 %s39, %s51
      %s109 = ssub.s32 %s40, %s47
      %s110 = sor.u32 %s108, %s109
      %p111 = scmp.eq.s32.totalorder %s110, 0
      %s113 = sadd.s32 %s112, 1
      %s114 = scalar_select %p111, %s112, %s113
      %p117 = pneg %p111
      %p118 = scmp.eq.s32.totalorder %s32, 1
      %p119 = por %p117, %p118
      %p120 = scmp.ne.s32.totalorder %s112, %s115
      %p121 = scmp.eq.s32.totalorder %s32, 0
      %p122 = por %p120, %p121
      %p123 = scmp.ne.s32.totalorder %s112, %s115
      %p124 = scmp.eq.s32.totalorder %s37, 1
      %p125 = por %p123, %p124
      %p126 = scmp.ne.s32.totalorder %s115, %s116
      %p127 = scmp.eq.s32.totalorder %s37, 0
      %p128 = por %p126, %p127
      %p129 = scmp.ne.s32.totalorder %s115, %s116
      %p130 = scmp.eq.s32.totalorder %s38, 1
      %p131 = por %p129, %p130
      %p133 = scmp.ne.s32.totalorder %s116, %s132
      %p134 = scmp.eq.s32.totalorder %s38, 0
      %p135 = por %p133, %p134
      %s137 = sadd.s32 %s136, 1
      %p140 = scmp.eq.s32.totalorder %s32, 1
      %p141 = scmp.ne.s32.totalorder %s136, %s138
      %p142 = scmp.eq.s32.totalorder %s32, 0
      %p143 = por %p141, %p142
      %p144 = scmp.ne.s32.totalorder %s136, %s138
      %p145 = scmp.eq.s32.totalorder %s37, 1
      %p146 = por %p144, %p145
      %p147 = scmp.ne.s32.totalorder %s138, %s139
      %p148 = scmp.eq.s32.totalorder %s37, 0
      %p149 = por %p147, %p148
      %p150 = scmp.ne.s32.totalorder %s138, %s139
      %p151 = scmp.eq.s32.totalorder %s38, 1
      %p152 = por %p150, %p151
      %p154 = scmp.ne.s32.totalorder %s139, %s153
      %p155 = scmp.eq.s32.totalorder %s38, 0
      %p156 = por %p154, %p155
      %s158 = sadd.s32 %s157, 1
      %p161 = scmp.eq.s32.totalorder %s32, 1
      %p162 = scmp.ne.s32.totalorder %s157, %s159
      %p163 = scmp.eq.s32.totalorder %s32, 0
      %p164 = por %p162, %p163
      %p165 = scmp.ne.s32.totalorder %s157, %s159
      %p166 = scmp.eq.s32.totalorder %s37, 1
      %p167 = por %p165, %p166
      %p168 = scmp.ne.s32.totalorder %s159, %s160
      %p169 = scmp.eq.s32.totalorder %s37, 0
      %p170 = por %p168, %p169
      %p171 = scmp.ne.s32.totalorder %s159, %s160
      %p172 = scmp.eq.s32.totalorder %s38, 1
      %p173 = por %p171, %p172
      %p175 = scmp.ne.s32.totalorder %s160, %s174
      %p176 = scmp.eq.s32.totalorder %s38, 0
      %p177 = por %p175, %p176
      %s179 = sadd.s32 %s178, 1
      %p182 = scmp.eq.s32.totalorder %s32, 1
      %p183 = scmp.ne.s32.totalorder %s178, %s180
      %p184 = scmp.eq.s32.totalorder %s32, 0
      %p185 = por %p183, %p184
      %p186 = scmp.ne.s32.totalorder %s178, %s180
      %p187 = scmp.eq.s32.totalorder %s37, 1
      %p188 = por %p186, %p187
      %p189 = scmp.ne.s32.totalorder %s180, %s181
      %p190 = scmp.eq.s32.totalorder %s37, 0
      %p191 = por %p189, %p190
      %p192 = scmp.ne.s32.totalorder %s180, %s181
      %p193 = scmp.eq.s32.totalorder %s38, 1
      %p194 = por %p192, %p193
      %p196 = scmp.ne.s32.totalorder %s181, %s195
      %p197 = scmp.eq.s32.totalorder %s38, 0
      %p198 = por %p196, %p197
      %s200 = sadd.s32 %s199, 1
      %p203 = scmp.eq.s32.totalorder %s32, 1
      %p204 = scmp.ne.s32.totalorder %s199, %s201
      %p205 = scmp.eq.s32.totalorder %s32, 0
      %p206 = por %p204, %p205
      %p207 = scmp.ne.s32.totalorder %s199, %s201
      %p208 = scmp.eq.s32.totalorder %s37, 1
      %p209 = por %p207, %p208
      %p210 = scmp.ne.s32.totalorder %s201, %s202
      %p211 = scmp.eq.s32.totalorder %s37, 0
      %p212 = por %p210, %p211
      %p213 = scmp.ne.s32.totalorder %s201, %s202
      %p214 = scmp.eq.s32.totalorder %s38, 1
      %p215 = por %p213, %p214
      %p217 = scmp.ne.s32.totalorder %s202, %s216
      %p218 = scmp.eq.s32.totalorder %s38, 0
      %p219 = por %p217, %p218
      %s221 = sadd.s32 %s220, 1
      %p224 = scmp.eq.s32.totalorder %s32, 1
      %p225 = scmp.ne.s32.totalorder %s220, %s222
      %p226 = scmp.eq.s32.totalorder %s32, 0
      %p227 = por %p225, %p226
      %p228 = scmp.ne.s32.totalorder %s220, %s222
      %p229 = scmp.eq.s32.totalorder %s37, 1
      %p230 = por %p228, %p229
      %p231 = scmp.ne.s32.totalorder %s222, %s223
      %p232 = scmp.eq.s32.totalorder %s37, 0
      %p233 = por %p231, %p232
      %p234 = scmp.ne.s32.totalorder %s222, %s223
      %p235 = scmp.eq.s32.totalorder %s38, 1
      %p236 = por %p234, %p235
      %p238 = scmp.ne.s32.totalorder %s223, %s237
      %p239 = scmp.eq.s32.totalorder %s38, 0
      %p240 = por %p238, %p239
      %s242 = sadd.s32 %s241, 1
      %p245 = scmp.eq.s32.totalorder %s32, 1
      %p246 = scmp.ne.s32.totalorder %s241, %s243
      %p247 = scmp.eq.s32.totalorder %s32, 0
      %p248 = por %p246, %p247
      %p249 = scmp.ne.s32.totalorder %s241, %s243
      %p250 = scmp.eq.s32.totalorder %s37, 1
      %p251 = por %p249, %p250
      %p252 = scmp.ne.s32.totalorder %s243, %s244
      %p253 = scmp.eq.s32.totalorder %s37, 0
      %p254 = por %p252, %p253
      %p255 = scmp.ne.s32.totalorder %s243, %s244
      %p256 = scmp.eq.s32.totalorder %s38, 1
      %p257 = por %p255, %p256
      %p259 = scmp.ne.s32.totalorder %s244, %s258
      %p260 = scmp.eq.s32.totalorder %s38, 0
      %p261 = por %p259, %p260
      %s262 = ssub.s32 %s39, %s51
      %s263 = ssub.s32 %s40, %s47
      %s264 = sor.u32 %s262, %s263
      %p265 = scmp.eq.s32.totalorder %s264, 0
      %s267 = sadd.s32 %s266, 1
      %s268 = scalar_select %p265, %s266, %s267
      %p271 = pneg %p265
      %p272 = scmp.eq.s32.totalorder %s32, 1
      %p273 = por %p271, %p272
      %p274 = scmp.ne.s32.totalorder %s266, %s269
      %p275 = scmp.eq.s32.totalorder %s32, 0
      %p276 = por %p274, %p275
      %p277 = scmp.ne.s32.totalorder %s266, %s269
      %p278 = scmp.eq.s32.totalorder %s37, 1
      %p279 = por %p277, %p278
      %p280 = scmp.ne.s32.totalorder %s269, %s270
      %p281 = scmp.eq.s32.totalorder %s37, 0
      %p282 = por %p280, %p281
      %p283 = scmp.ne.s32.totalorder %s269, %s270
      %p284 = scmp.eq.s32.totalorder %s38, 1
      %p285 = por %p283, %p284
      %p287 = scmp.ne.s32.totalorder %s270, %s286
      %p288 = scmp.eq.s32.totalorder %s38, 0
      %p289 = por %p287, %p288
      %s290 = ssub.s32 %s39, %s51
      %s291 = ssub.s32 %s40, %s47
      %s292 = sor.u32 %s290, %s291
      %p293 = scmp.eq.s32.totalorder %s292, 0
      %s295 = sadd.s32 %s294, 1
      %s296 = scalar_select %p293, %s294, %s295
      %p299 = pneg %p293
      %p300 = scmp.eq.s32.totalorder %s32, 1
      %p301 = por %p299, %p300
      %p302 = scmp.ne.s32.totalorder %s294, %s297
      %p303 = scmp.eq.s32.totalorder %s32, 0
      %p304 = por %p302, %p303
      %p305 = scmp.ne.s32.totalorder %s294, %s297
      %p306 = scmp.eq.s32.totalorder %s37, 1
      %p307 = por %p305, %p306
      %p308 = scmp.ne.s32.totalorder %s297, %s298
      %p309 = scmp.eq.s32.totalorder %s37, 0
      %p310 = por %p308, %p309
      %p311 = scmp.ne.s32.totalorder %s297, %s298
      %p312 = scmp.eq.s32.totalorder %s38, 1
      %p313 = por %p311, %p312
      %p315 = scmp.ne.s32.totalorder %s298, %s314
      %p316 = scmp.eq.s32.totalorder %s38, 0
      %p317 = por %p315, %p316
      %s318 = ssub.s32 %s39, %s51
      %s319 = ssub.s32 %s40, %s47
      %s320 = sor.u32 %s318, %s319
      %p321 = scmp.eq.s32.totalorder %s320, 0
      %s323 = sadd.s32 %s322, 1
      %s324 = scalar_select %p321, %s322, %s323
      %p327 = pneg %p321
      %p328 = scmp.eq.s32.totalorder %s32, 1
      %p329 = por %p327, %p328
      %p330 = scmp.ne.s32.totalorder %s322, %s325
      %p331 = scmp.eq.s32.totalorder %s32, 0
      %p332 = por %p330, %p331
      %p333 = scmp.ne.s32.totalorder %s322, %s325
      %p334 = scmp.eq.s32.totalorder %s37, 1
      %p335 = por %p333, %p334
      %p336 = scmp.ne.s32.totalorder %s325, %s326
      %p337 = scmp.eq.s32.totalorder %s37, 0
      %p338 = por %p336, %p337
      %p339 = scmp.ne.s32.totalorder %s325, %s326
      %p340 = scmp.eq.s32.totalorder %s38, 1
      %p341 = por %p339, %p340
      %p343 = scmp.ne.s32.totalorder %s326, %s342
      %p344 = scmp.eq.s32.totalorder %s38, 0
      %p345 = por %p343, %p344
      %p346 = scmp.le.s32.totalorder 1, %s32
      %p347 = scmp.lt.s32.totalorder %s32, 3
      %p348 = pnand %p346, %p347
      %p349 = pneg %p348
      // Predicated region
      $region9: #{tpu_custom_call.1} parent=5 // pred_check
        _
      $region10: #{tpu_custom_call.1} parent=5 // pred_check_branch
        %351 = sbr.rel (%p348) target = $region12
      $region11: #{tpu_custom_call.1} parent=5 // pred_region
        %s352 = ssub.s32 %s32, 1
        // Predicated region
        $region13: #{tpu_custom_call.1} parent=11 // pred_check
          %p353 = pneg %p149
        $region14: #{tpu_custom_call.1} parent=11 // pred_check_branch
          %355 = sbr.rel (%p353) target = $region16
        $region15: #{tpu_custom_call.1} parent=11 // pred_region
          %s357 = ssub.s32 512, 512
          %358 = vsyncadd [#allocation9], %s357
          %s359 = sshll.u32 [#allocation8], 4
          %s360 = int_to_ptr.vmem [resolvable:$true] %s359
          %365 = dma.hbm_to_vmem [thread:$0]  %s3, 512, %s360, [#allocation9], 128, 128, 8
        $region16: #{tpu_custom_call.1} parent=11 // pred_fallthru
          _
        // Predicated region
        $region17: #{tpu_custom_call.1} parent=11 // pred_check
          %p366 = pneg %p170
        $region18: #{tpu_custom_call.1} parent=11 // pred_check_branch
          %368 = sbr.rel (%p366) target = $region20
        $region19: #{tpu_custom_call.1} parent=11 // pred_region
          _
        $region20: #{tpu_custom_call.1} parent=11 // pred_fallthru
          _
        // Predicated region
        $region21: #{tpu_custom_call.1} parent=11 // pred_check
          %p369 = pneg %p191
        $region22: #{tpu_custom_call.1} parent=11 // pred_check_branch
          %371 = sbr.rel (%p369) target = $region24
        $region23: #{tpu_custom_call.1} parent=11 // pred_region
          %s373 = ssub.s32 512, 512
          %374 = vsyncadd [#allocation9], %s373
          %s375 = sshll.u32 [#allocation10], 4
          %s376 = int_to_ptr.vmem [resolvable:$true] %s375
          %381 = dma.hbm_to_vmem [thread:$0]  %s5, 512, %s376, [#allocation9], 128, 128, 8
        $region24: #{tpu_custom_call.1} parent=11 // pred_fallthru
          _
        // Predicated region
        $region25: #{tpu_custom_call.1} parent=11 // pred_check
          %p382 = pneg %p212
        $region26: #{tpu_custom_call.1} parent=11 // pred_check_branch
          %384 = sbr.rel (%p382) target = $region28
        $region27: #{tpu_custom_call.1} parent=11 // pred_region
          _
        $region28: #{tpu_custom_call.1} parent=11 // pred_fallthru
          _
        // Predicated region
        $region29: #{tpu_custom_call.1} parent=11 // pred_check
          %p385 = pneg %p233
        $region30: #{tpu_custom_call.1} parent=11 // pred_check_branch
          %387 = sbr.rel (%p385) target = $region32
        $region31: #{tpu_custom_call.1} parent=11 // pred_region
          %s389 = ssub.s32 512, 512
          %390 = vsyncadd [#allocation12], %s389
          %s391 = sshll.u32 [#allocation11], 4
          %s392 = int_to_ptr.vmem [resolvable:$true] %s391
          %397 = dma.hbm_to_vmem [thread:$0]  %s7, 512, %s392, [#allocation12], 128, 128, 8
        $region32: #{tpu_custom_call.1} parent=11 // pred_fallthru
          _
        // Predicated region
        $region33: #{tpu_custom_call.1} parent=11 // pred_check
          %p398 = pneg %p254
        $region34: #{tpu_custom_call.1} parent=11 // pred_check_branch
          %400 = sbr.rel (%p398) target = $region36
        $region35: #{tpu_custom_call.1} parent=11 // pred_region
          _
        $region36: #{tpu_custom_call.1} parent=11 // pred_fallthru
          _
      $region12: #{tpu_custom_call.1} parent=5 // pred_fallthru
        _
      %p401 = scmp.lt.s32.totalorder %s32, 2
      // Predicated region
      $region37: #{tpu_custom_call.1} parent=5 // pred_check
        %p402 = pneg %p401
      $region38: #{tpu_custom_call.1} parent=5 // pred_check_branch
        %404 = sbr.rel (%p402) target = $region40
      $region39: #{tpu_custom_call.1} parent=5 // pred_region
        // Predicated region
        $region41: #{tpu_custom_call.1} parent=39 // pred_check
          %p405 = pneg %p66
        $region42: #{tpu_custom_call.1} parent=39 // pred_check_branch
          %407 = sbr.rel (%p405) target = $region44
        $region43: #{tpu_custom_call.1} parent=39 // pred_region
          %s408 = sand.u32 %s56, 1
          %s409 = scalar_lea.sflag [#allocation3], %s408
          %s410 = sand.u32 %s56, 1
          %s411 = smul.addr %s410, 8
          %s412 = scalar_lea.vmem [#allocation2], %s411
          %s414 = ssub.s32 128, 128
          %415 = vsyncadd %s409, %s414
          %s416 = sadd.s32 %s40, %s39
          %s417 = smul.addr %s416, 128
          %s418 = scalar_lea.hbm %s0, %s417
          %s420 = sshll.u32 %s412, 4
          %s421 = int_to_ptr.vmem [resolvable:$true] %s420
          %423 = dma.hbm_to_vmem [thread:$0]  %s418, 128, %s421, %s409
        $region44: #{tpu_custom_call.1} parent=39 // pred_fallthru
          _
        // Predicated region
        $region45: #{tpu_custom_call.1} parent=39 // pred_check
          %p424 = pneg %p94
        $region46: #{tpu_custom_call.1} parent=39 // pred_check_branch
          %426 = sbr.rel (%p424) target = $region48
        $region47: #{tpu_custom_call.1} parent=39 // pred_region
          %s427 = sand.u32 %s32, 1
          %s428 = scalar_lea.sflag [#allocation6], %s427
          %s429 = sand.u32 %s84, 1
          %s430 = smul.addr %s429, 8
          %s431 = scalar_lea.vmem [#allocation5], %s430
          %s433 = ssub.s32 128, 128
          %434 = vsyncadd %s428, %s433
          %s435 = sadd.s32 %s40, %s39
          %s436 = smul.addr %s435, 128
          %s437 = scalar_lea.hbm %s1, %s436
          %s439 = sshll.u32 %s431, 4
          %s440 = int_to_ptr.vmem [resolvable:$true] %s439
          %442 = dma.hbm_to_vmem [thread:$0]  %s437, 128, %s440, %s428
        $region48: #{tpu_custom_call.1} parent=39 // pred_fallthru
          _
        // Predicated region
        $region49: #{tpu_custom_call.1} parent=39 // pred_check
          %p443 = pneg %p122
        $region50: #{tpu_custom_call.1} parent=39 // pred_check_branch
          %445 = sbr.rel (%p443) target = $region52
        $region51: #{tpu_custom_call.1} parent=39 // pred_region
          %s446 = sand.u32 %s32, 1
          %s447 = scalar_lea.sflag [#allocation6], %s446
          %s448 = sand.u32 %s112, 1
          %s449 = smul.addr %s448, 8
          %s450 = scalar_lea.vmem [#allocation7], %s449
          %s452 = ssub.s32 128, 128
          %453 = vsyncadd %s447, %s452
          %s454 = sadd.s32 %s40, %s39
          %s455 = smul.addr %s454, 128
          %s456 = scalar_lea.hbm %s2, %s455
          %s458 = sshll.u32 %s450, 4
          %s459 = int_to_ptr.vmem [resolvable:$true] %s458
          %461 = dma.hbm_to_vmem [thread:$0]  %s456, 128, %s459, %s447
        $region52: #{tpu_custom_call.1} parent=39 // pred_fallthru
          _
      $region40: #{tpu_custom_call.1} parent=5 // pred_fallthru
        _
      %p462 = scmp.le.s32.totalorder 1, %s32
      %p463 = scmp.lt.s32.totalorder %s32, 3
      %p464 = pnand %p462, %p463
      %p465 = pneg %p464
      // Predicated region
      $region53: #{tpu_custom_call.1} parent=5 // pred_check
        _
      $region54: #{tpu_custom_call.1} parent=5 // pred_check_branch
        %467 = sbr.rel (%p464) target = $region56
      $region55: #{tpu_custom_call.1} parent=5 // pred_region
        %s468 = ssub.s32 %s32, 1
        %s469 = sand.u32 %s59, 1
        %s470 = scalar_lea.sflag [#allocation3], %s469
        %s471 = sand.u32 %s59, 1
        %s472 = smul.addr %s471, 8
        %s473 = scalar_lea.vmem [#allocation2], %s472
        // Predicated region
        $region57: #{tpu_custom_call.1} parent=55 // pred_check
          %p474 = pneg %p72
        $region58: #{tpu_custom_call.1} parent=55 // pred_check_branch
          %476 = sbr.rel (%p474) target = $region60
        $region59: #{tpu_custom_call.1} parent=55 // pred_region
          %477 = dma.done %s470, 128
        $region60: #{tpu_custom_call.1} parent=55 // pred_fallthru
          _
        %s478 = sand.u32 %s37, 1
        %s479 = scalar_lea.sflag [#allocation6], %s478
        %s480 = sand.u32 %s87, 1
        %s481 = smul.addr %s480, 8
        %s482 = scalar_lea.vmem [#allocation5], %s481
        // Predicated region
        $region61: #{tpu_custom_call.1} parent=55 // pred_check
          %p483 = pneg %p100
        $region62: #{tpu_custom_call.1} parent=55 // pred_check_branch
          %485 = sbr.rel (%p483) target = $region64
        $region63: #{tpu_custom_call.1} parent=55 // pred_region
          %486 = dma.done %s479, 128
        $region64: #{tpu_custom_call.1} parent=55 // pred_fallthru
          _
        %s487 = sand.u32 %s37, 1
        %s488 = scalar_lea.sflag [#allocation6], %s487
        %s489 = sand.u32 %s115, 1
        %s490 = smul.addr %s489, 8
        %s491 = scalar_lea.vmem [#allocation7], %s490
        // Predicated region
        $region65: #{tpu_custom_call.1} parent=55 // pred_check
          %p492 = pneg %p128
        $region66: #{tpu_custom_call.1} parent=55 // pred_check_branch
          %494 = sbr.rel (%p492) target = $region68
        $region67: #{tpu_custom_call.1} parent=55 // pred_region
          %495 = dma.done %s488, 128
        $region68: #{tpu_custom_call.1} parent=55 // pred_fallthru
          _
        // Predicated region
        $region69: #{tpu_custom_call.1} parent=55 // pred_check
          %p496 = pneg %p149
        $region70: #{tpu_custom_call.1} parent=55 // pred_check_branch
          %498 = sbr.rel (%p496) target = $region72
        $region71: #{tpu_custom_call.1} parent=55 // pred_region
          %499 = dma.done [#allocation9], 512
        $region72: #{tpu_custom_call.1} parent=55 // pred_fallthru
          _
        // Predicated region
        $region73: #{tpu_custom_call.1} parent=55 // pred_check
          %p500 = pneg %p191
        $region74: #{tpu_custom_call.1} parent=55 // pred_check_branch
          %502 = sbr.rel (%p500) target = $region76
        $region75: #{tpu_custom_call.1} parent=55 // pred_region
          %503 = dma.done [#allocation9], 512
        $region76: #{tpu_custom_call.1} parent=55 // pred_fallthru
          _
        // Predicated region
        $region77: #{tpu_custom_call.1} parent=55 // pred_check
          %p504 = pneg %p233
        $region78: #{tpu_custom_call.1} parent=55 // pred_check_branch
          %506 = sbr.rel (%p504) target = $region80
        $region79: #{tpu_custom_call.1} parent=55 // pred_region
          %507 = dma.done [#allocation12], 512
        $region80: #{tpu_custom_call.1} parent=55 // pred_fallthru
          _
        %s508 = sand.u32 %s59, 1
        %s509 = scalar_lea.sflag [#allocation3], %s508
        %s510 = sand.u32 %s59, 1
        %s511 = smul.addr %s510, 8
        %s512 = scalar_lea.vmem [#allocation2], %s511
        %p513 = pneg %p72
        %p514 = pneg %p69
        %s515 = sand.u32 %s37, 1
        %s516 = scalar_lea.sflag [#allocation6], %s515
        %s517 = sand.u32 %s87, 1
        %s518 = smul.addr %s517, 8
        %s519 = scalar_lea.vmem [#allocation5], %s518
        %p520 = pneg %p100
        %p521 = pneg %p97
        %s522 = sand.u32 %s37, 1
        %s523 = scalar_lea.sflag [#allocation6], %s522
        %s524 = sand.u32 %s115, 1
        %s525 = smul.addr %s524, 8
        %s526 = scalar_lea.vmem [#allocation7], %s525
        %p527 = pneg %p128
        %p528 = pneg %p125
        %p529 = pneg %p149
        %p530 = pneg %p146
        %p531 = pneg %p170
        %p532 = pneg %p167
        %p533 = pneg %p191
        %p534 = pneg %p188
        %p535 = pneg %p212
        %p536 = pneg %p209
        %p537 = pneg %p233
        %p538 = pneg %p230
        %p539 = pneg %p254
        %p540 = pneg %p251
        %p541 = pneg %p282
        %p542 = pneg %p279
        %s543 = sand.u32 %s269, 1
        %s544 = scalar_lea.sflag [#allocation4], %s543
        %s545 = sand.u32 %s269, 1
        %s546 = smul.addr %s545, 32
        %s547 = scalar_lea.vmem [#allocation13], %s546
        %p548 = pneg %p310
        %p549 = pneg %p307
        %s550 = sand.u32 %s37, 1
        %s551 = scalar_lea.sflag [#allocation15], %s550
        %s552 = sand.u32 %s297, 1
        %s553 = smul.addr %s552, 32
        %s554 = scalar_lea.vmem [#allocation14], %s553
        %p555 = pneg %p338
        %p556 = pneg %p335
        %s557 = sand.u32 %s37, 1
        %s558 = scalar_lea.sflag [#allocation15], %s557
        %s559 = sand.u32 %s325, 1
        %s560 = smul.addr %s559, 32
        %s561 = scalar_lea.vmem [#allocation16], %s560
        %v562 = vld [vmem:[%s473] sm:$0xff]
        %v563 = vld [vmem:[#allocation8] sm:$0xff]
        %v564 = vld [vmem:[#allocation8 + $0x8] sm:$0xff]
        %v565 = vld [vmem:[#allocation8 + $0x10] sm:$0xff]
        %v566 = vld [vmem:[#allocation8 + $0x18] sm:$0xff]
        %v567 = vld [vmem:[%s4] sm:$0x1]
        %v569 = vlaneseq
        %v570 = vshrl.u32 %v569, 7
        %v571 = vsub.s32 0, %v570
        %v572 = vrot.slane %v567, %v571
        %vm574 = vcmask 261120
        %v576 = vsel %vm574, %v562, 0
        %578 = vmatprep.subr.mxu0 0.0
        %579 = vmatpush1.msra.mxu0 %v563
        %580 = vmatprep.subr.mxu0 0.0
        %581 = vmatpush1.msra.mxu0 %v564
        %582 = vmatprep.subr.mxu0 0.0
        %583 = vmatpush1.msra.mxu0 %v565
        %584 = vmatprep.subr.mxu0 0.0
        %585 = vmatpush1.msra.mxu0 %v566
        %586 = vmatprep.subr.mxu0 0.0
        %587 = vmatpush1.msra.mxu0 0.0
        %588 = vmatprep.subr.mxu0 0.0
        %589 = vmatpush1.msra.mxu0 0.0
        %590 = vmatprep.subr.mxu0 0.0
        %591 = vmatpush1.msra.mxu0 0.0
        %592 = vmatprep.subr.mxu0 0.0
        %593 = vmatpush1.msra.mxu0 0.0
        %594 = vmatprep.subr.mxu0 0.0
        %595 = vmatpush1.msra.mxu0 0.0
        %596 = vmatprep.subr.mxu0 0.0
        %597 = vmatpush1.msra.mxu0 0.0
        %598 = vmatprep.subr.mxu0 0.0
        %599 = vmatpush1.msra.mxu0 0.0
        %600 = vmatprep.subr.mxu0 0.0
        %601 = vmatpush1.msra.mxu0 0.0
        %602 = vmatprep.subr.mxu0 0.0
        %603 = vmatpush1.msra.mxu0 0.0
        %604 = vmatprep.subr.mxu0 0.0
        %605 = vmatpush1.msra.mxu0 0.0
        %606 = vmatprep.subr.mxu0 0.0
        %607 = vmatpush1.msra.mxu0 0.0
        %608 = vmatprep.subr.mxu0 0.0
        %609 = vmatpush1.msra.mxu0 0.0
        %610 = vmatprep.subr.mxu0 0.0
        %611 = vmatpush1.msra.mxu0 0.0
        %612 = vmatprep.subr.mxu0 0.0
        %613 = vmatpush1.msra.mxu0 0.0
        %614 = vmatprep.subr.mxu0 0.0
        %615 = vmatpush1.msra.mxu0 0.0
        %616 = vmatprep.subr.mxu0 0.0
        %617 = vmatpush1.msra.mxu0 0.0
        %618 = vmatprep.subr.mxu0 0.0
        %619 = vmatpush1.msra.mxu0 0.0
        %620 = vmatprep.subr.mxu0 0.0
        %621 = vmatpush1.msra.mxu0 0.0
        %622 = vmatprep.subr.mxu0 0.0
        %623 = vmatpush1.msra.mxu0 0.0
        %624 = vmatprep.subr.mxu0 0.0
        %625 = vmatpush1.msra.mxu0 0.0
        %626 = vmatprep.subr.mxu0 0.0
        %627 = vmatpush1.msra.mxu0 0.0
        %628 = vmatprep.subr.mxu0 0.0
        %629 = vmatpush1.msra.mxu0 0.0
        %630 = vmatprep.subr.mxu0 0.0
        %631 = vmatpush1.msra.mxu0 0.0
        %632 = vmatprep.subr.mxu0 0.0
        %633 = vmatpush1.msra.mxu0 0.0
        %634 = vmatprep.subr.mxu0 0.0
        %635 = vmatpush1.msra.mxu0 0.0
        %636 = vmatprep.subr.mxu0 0.0
        %637 = vmatpush1.msra.mxu0 0.0
        %638 = vmatprep.subr.mxu0 0.0
        %639 = vmatpush1.msra.mxu0 0.0
        %640 = vmatprep.subr.mxu0 0.0
        %641 = vmatpush1.msra.mxu0 0.0
        %642 = vmatprep.mubr.f32.mxu0 0.0
        %643 = vmatmul.mubr.f32.gmra.mrb[0].mxu0 %v576
        %v644 = vpop.f32.mrb[0].mxu0
        %v645 = vadd.f32 %v572, %v644
        %v646 = vpop.f32.mrb[0].mxu0
        %647 = vdwg.mxu0
        %v648 = vmul.f32 %v645, 0.35355338
        %650 = vrot.lane.b32.xlu0 %v648, 120
        %v651 = vpop.permute.xlu0 %650
        %653 = vrot.lane.b32.xlu0 %v648, 112
        %v654 = vpop.permute.xlu0 %653
        %656 = vrot.lane.b32.xlu0 %v648, 104
        %v657 = vpop.permute.xlu0 %656
        %v659 = vcombine.low %v648, %v654
        %v660 = vcombine.high %v648, %v654
        %v662 = vunpack.c.l.s4 1983009808
        %v663 = vunpack.c.0.s8 %v662
        %v664 = vlaneseq
        %v665 = vshrl.u32 %v664, 7
        %v666 = vsub.s32 %v663, %v665
        %v667 = vrot.slane %v659, %v666
        %v669 = vunpack.c.l.s4 1983009808
        %v670 = vunpack.c.0.s8 %v669
        %v671 = vlaneseq
        %v672 = vshrl.u32 %v671, 7
        %v673 = vsub.s32 %v670, %v672
        %v674 = vrot.slane %v660, %v673
        %v675 = vcombine.low %v651, %v657
        %v676 = vcombine.high %v651, %v657
        %v678 = vunpack.c.l.s4 1983009808
        %v679 = vunpack.c.0.s8 %v678
        %v680 = vlaneseq
        %v681 = vshrl.u32 %v680, 7
        %v682 = vsub.s32 %v679, %v681
        %v683 = vrot.slane %v675, %v682
        %v685 = vunpack.c.l.s4 1983009808
        %v686 = vunpack.c.0.s8 %v685
        %v687 = vlaneseq
        %v688 = vshrl.u32 %v687, 7
        %v689 = vsub.s32 %v686, %v688
        %v690 = vrot.slane %v676, %v689
        %v691 = vcombine.low %v667, %v683
        %v692 = vcombine.high %v667, %v683
        %v694 = vunpack.c.l.s4 1934713408
        %v695 = vunpack.c.0.s8 %v694
        %v696 = vlaneseq
        %v697 = vshrl.u32 %v696, 7
        %v698 = vsub.s32 %v695, %v697
        %v699 = vrot.slane %v691, %v698
        %v701 = vunpack.c.l.s4 1934713408
        %v702 = vunpack.c.0.s8 %v701
        %v703 = vlaneseq
        %v704 = vshrl.u32 %v703, 7
        %v705 = vsub.s32 %v702, %v704
        %v706 = vrot.slane %v692, %v705
        %v707 = vcombine.low %v674, %v690
        %v708 = vcombine.high %v674, %v690
        %v710 = vunpack.c.l.s4 1934713408
        %v711 = vunpack.c.0.s8 %v710
        %v712 = vlaneseq
        %v713 = vshrl.u32 %v712, 7
        %v714 = vsub.s32 %v711, %v713
        %v715 = vrot.slane %v707, %v714
        %v717 = vunpack.c.l.s4 1934713408
        %v718 = vunpack.c.0.s8 %v717
        %v719 = vlaneseq
        %v720 = vshrl.u32 %v719, 7
        %v721 = vsub.s32 %v718, %v720
        %v722 = vrot.slane %v708, %v721
        %v723 = vcombine.high %v699, 0.0
        %v724 = vcombine.high %v706, 0.0
        %v725 = vcombine.high %v715, 0.0
        %v726 = vcombine.high %v722, 0.0
        %v727 = vcombine.low %v699, %v706
        %v729 = vunpack.c.l.s4 1983009808
        %v730 = vunpack.c.0.s8 %v729
        %v731 = vlaneseq
        %v732 = vshrl.u32 %v731, 7
        %v733 = vsub.s32 %v730, %v732
        %v734 = vrot.slane %v727, %v733
        %v735 = vcombine.low %v723, %v724
        %v737 = vunpack.c.l.s4 1983009808
        %v738 = vunpack.c.0.s8 %v737
        %v739 = vlaneseq
        %v740 = vshrl.u32 %v739, 7
        %v741 = vsub.s32 %v738, %v740
        %v742 = vrot.slane %v735, %v741
        %v743 = vcombine.low %v715, %v722
        %v745 = vunpack.c.l.s4 1983009808
        %v746 = vunpack.c.0.s8 %v745
        %v747 = vlaneseq
        %v748 = vshrl.u32 %v747, 7
        %v749 = vsub.s32 %v746, %v748
        %v750 = vrot.slane %v743, %v749
        %v751 = vcombine.low %v725, %v726
        %v753 = vunpack.c.l.s4 1983009808
        %v754 = vunpack.c.0.s8 %v753
        %v755 = vlaneseq
        %v756 = vshrl.u32 %v755, 7
        %v757 = vsub.s32 %v754, %v756
        %v758 = vrot.slane %v751, %v757
        %v759 = vcombine.low %v734, %v742
        %v760 = vcombine.high %v734, %v742
        %v762 = vunpack.c.l.s4 1934713408
        %v763 = vunpack.c.0.s8 %v762
        %v764 = vlaneseq
        %v765 = vshrl.u32 %v764, 7
        %v766 = vsub.s32 %v763, %v765
        %v767 = vrot.slane %v759, %v766
        %v769 = vunpack.c.l.s4 1934713408
        %v770 = vunpack.c.0.s8 %v769
        %v771 = vlaneseq
        %v772 = vshrl.u32 %v771, 7
        %v773 = vsub.s32 %v770, %v772
        %v774 = vrot.slane %v760, %v773
        %v775 = vcombine.low %v750, %v758
        %v776 = vcombine.high %v750, %v758
        %v778 = vunpack.c.l.s4 1934713408
        %v779 = vunpack.c.0.s8 %v778
        %v780 = vlaneseq
        %v781 = vshrl.u32 %v780, 7
        %v782 = vsub.s32 %v779, %v781
        %v783 = vrot.slane %v775, %v782
        %v785 = vunpack.c.l.s4 1934713408
        %v786 = vunpack.c.0.s8 %v785
        %v787 = vlaneseq
        %v788 = vshrl.u32 %v787, 7
        %v789 = vsub.s32 %v786, %v788
        %v790 = vrot.slane %v776, %v789
        %v791 = vcombine.low %v767, %v783
        %v792 = vcombine.high %v767, %v783
        %v793 = vcombine.low %v774, %v790
        %v794 = vcombine.high %v774, %v790
        %vm795 = vcmask 64512
        %796 = vst.msk [vmem:[%s547] sm:$0xff] %vm795, %v791
        %797 = vst.msk [vmem:[%s547 + $0x8] sm:$0xff] %vm795, %v792
        %798 = vst.msk [vmem:[%s547 + $0x10] sm:$0xff] %vm795, %v793
        %799 = vst.msk [vmem:[%s547 + $0x18] sm:$0xff] %vm795, %v794
        %v800 = vld [vmem:[%s482] sm:$0xff]
        %v801 = vld [vmem:[#allocation10] sm:$0xff]
        %v802 = vld [vmem:[#allocation10 + $0x8] sm:$0xff]
        %v803 = vld [vmem:[#allocation10 + $0x10] sm:$0xff]
        %v804 = vld [vmem:[#allocation10 + $0x18] sm:$0xff]
        %v805 = vld [vmem:[%s6] sm:$0x1]
        %v807 = vlaneseq
        %v808 = vshrl.u32 %v807, 7
        %v809 = vsub.s32 0, %v808
        %v810 = vrot.slane %v805, %v809
        %v813 = vsel %vm574, %v800, 0
        %815 = vmatprep.subr.mxu0 0.0
        %816 = vmatpush1.msra.mxu0 %v801
        %817 = vmatprep.subr.mxu0 0.0
        %818 = vmatpush1.msra.mxu0 %v802
        %819 = vmatprep.subr.mxu0 0.0
        %820 = vmatpush1.msra.mxu0 %v803
        %821 = vmatprep.subr.mxu0 0.0
        %822 = vmatpush1.msra.mxu0 %v804
        %823 = vmatprep.subr.mxu0 0.0
        %824 = vmatpush1.msra.mxu0 0.0
        %825 = vmatprep.subr.mxu0 0.0
        %826 = vmatpush1.msra.mxu0 0.0
        %827 = vmatprep.subr.mxu0 0.0
        %828 = vmatpush1.msra.mxu0 0.0
        %829 = vmatprep.subr.mxu0 0.0
        %830 = vmatpush1.msra.mxu0 0.0
        %831 = vmatprep.subr.mxu0 0.0
        %832 = vmatpush1.msra.mxu0 0.0
        %833 = vmatprep.subr.mxu0 0.0
        %834 = vmatpush1.msra.mxu0 0.0
        %835 = vmatprep.subr.mxu0 0.0
        %836 = vmatpush1.msra.mxu0 0.0
        %837 = vmatprep.subr.mxu0 0.0
        %838 = vmatpush1.msra.mxu0 0.0
        %839 = vmatprep.subr.mxu0 0.0
        %840 = vmatpush1.msra.mxu0 0.0
        %841 = vmatprep.subr.mxu0 0.0
        %842 = vmatpush1.msra.mxu0 0.0
        %843 = vmatprep.subr.mxu0 0.0
        %844 = vmatpush1.msra.mxu0 0.0
        %845 = vmatprep.subr.mxu0 0.0
        %846 = vmatpush1.msra.mxu0 0.0
        %847 = vmatprep.subr.mxu0 0.0
        %848 = vmatpush1.msra.mxu0 0.0
        %849 = vmatprep.subr.mxu0 0.0
        %850 = vmatpush1.msra.mxu0 0.0
        %851 = vmatprep.subr.mxu0 0.0
        %852 = vmatpush1.msra.mxu0 0.0
        %853 = vmatprep.subr.mxu0 0.0
        %854 = vmatpush1.msra.mxu0 0.0
        %855 = vmatprep.subr.mxu0 0.0
        %856 = vmatpush1.msra.mxu0 0.0
        %857 = vmatprep.subr.mxu0 0.0
        %858 = vmatpush1.msra.mxu0 0.0
        %859 = vmatprep.subr.mxu0 0.0
        %860 = vmatpush1.msra.mxu0 0.0
        %861 = vmatprep.subr.mxu0 0.0
        %862 = vmatpush1.msra.mxu0 0.0
        %863 = vmatprep.subr.mxu0 0.0
        %864 = vmatpush1.msra.mxu0 0.0
        %865 = vmatprep.subr.mxu0 0.0
        %866 = vmatpush1.msra.mxu0 0.0
        %867 = vmatprep.subr.mxu0 0.0
        %868 = vmatpush1.msra.mxu0 0.0
        %869 = vmatprep.subr.mxu0 0.0
        %870 = vmatpush1.msra.mxu0 0.0
        %871 = vmatprep.subr.mxu0 0.0
        %872 = vmatpush1.msra.mxu0 0.0
        %873 = vmatprep.subr.mxu0 0.0
        %874 = vmatpush1.msra.mxu0 0.0
        %875 = vmatprep.subr.mxu0 0.0
        %876 = vmatpush1.msra.mxu0 0.0
        %877 = vmatprep.subr.mxu0 0.0
        %878 = vmatpush1.msra.mxu0 0.0
        %879 = vmatprep.mubr.f32.mxu0 0.0
        %880 = vmatmul.mubr.f32.gmra.mrb[0].mxu0 %v813
        %v881 = vpop.f32.mrb[0].mxu0
        %v882 = vadd.f32 %v810, %v881
        %v883 = vpop.f32.mrb[0].mxu0
        %884 = vdwg.mxu0
        %886 = vrot.lane.b32.xlu0 %v882, 120
        %v887 = vpop.permute.xlu0 %886
        %889 = vrot.lane.b32.xlu0 %v882, 112
        %v890 = vpop.permute.xlu0 %889
        %892 = vrot.lane.b32.xlu0 %v882, 104
        %v893 = vpop.permute.xlu0 %892
        %v895 = vcombine.low %v882, %v890
        %v896 = vcombine.high %v882, %v890
        %v898 = vunpack.c.l.s4 1983009808
        %v899 = vunpack.c.0.s8 %v898
        %v900 = vlaneseq
        %v901 = vshrl.u32 %v900, 7
        %v902 = vsub.s32 %v899, %v901
        %v903 = vrot.slane %v895, %v902
        %v905 = vunpack.c.l.s4 1983009808
        %v906 = vunpack.c.0.s8 %v905
        %v907 = vlaneseq
        %v908 = vshrl.u32 %v907, 7
        %v909 = vsub.s32 %v906, %v908
        %v910 = vrot.slane %v896, %v909
        %v911 = vcombine.low %v887, %v893
        %v912 = vcombine.high %v887, %v893
        %v914 = vunpack.c.l.s4 1983009808
        %v915 = vunpack.c.0.s8 %v914
        %v916 = vlaneseq
        %v917 = vshrl.u32 %v916, 7
        %v918 = vsub.s32 %v915, %v917
        %v919 = vrot.slane %v911, %v918
        %v921 = vunpack.c.l.s4 1983009808
        %v922 = vunpack.c.0.s8 %v921
        %v923 = vlaneseq
        %v924 = vshrl.u32 %v923, 7
        %v925 = vsub.s32 %v922, %v924
        %v926 = vrot.slane %v912, %v925
        %v927 = vcombine.low %v903, %v919
        %v928 = vcombine.high %v903, %v919
        %v930 = vunpack.c.l.s4 1934713408
        %v931 = vunpack.c.0.s8 %v930
        %v932 = vlaneseq
        %v933 = vshrl.u32 %v932, 7
        %v934 = vsub.s32 %v931, %v933
        %v935 = vrot.slane %v927, %v934
        %v937 = vunpack.c.l.s4 1934713408
        %v938 = vunpack.c.0.s8 %v937
        %v939 = vlaneseq
        %v940 = vshrl.u32 %v939, 7
        %v941 = vsub.s32 %v938, %v940
        %v942 = vrot.slane %v928, %v941
        %v943 = vcombine.low %v910, %v926
        %v944 = vcombine.high %v910, %v926
        %v946 = vunpack.c.l.s4 1934713408
        %v947 = vunpack.c.0.s8 %v946
        %v948 = vlaneseq
        %v949 = vshrl.u32 %v948, 7
        %v950 = vsub.s32 %v947, %v949
        %v951 = vrot.slane %v943, %v950
        %v953 = vunpack.c.l.s4 1934713408
        %v954 = vunpack.c.0.s8 %v953
        %v955 = vlaneseq
        %v956 = vshrl.u32 %v955, 7
        %v957 = vsub.s32 %v954, %v956
        %v958 = vrot.slane %v944, %v957
        %v959 = vcombine.high %v935, 0.0
        %v960 = vcombine.high %v942, 0.0
        %v961 = vcombine.high %v951, 0.0
        %v962 = vcombine.high %v958, 0.0
        %v963 = vcombine.low %v935, %v942
        %v965 = vunpack.c.l.s4 1983009808
        %v966 = vunpack.c.0.s8 %v965
        %v967 = vlaneseq
        %v968 = vshrl.u32 %v967, 7
        %v969 = vsub.s32 %v966, %v968
        %v970 = vrot.slane %v963, %v969
        %v971 = vcombine.low %v959, %v960
        %v973 = vunpack.c.l.s4 1983009808
        %v974 = vunpack.c.0.s8 %v973
        %v975 = vlaneseq
        %v976 = vshrl.u32 %v975, 7
        %v977 = vsub.s32 %v974, %v976
        %v978 = vrot.slane %v971, %v977
        %v979 = vcombine.low %v951, %v958
        %v981 = vunpack.c.l.s4 1983009808
        %v982 = vunpack.c.0.s8 %v981
        %v983 = vlaneseq
        %v984 = vshrl.u32 %v983, 7
        %v985 = vsub.s32 %v982, %v984
        %v986 = vrot.slane %v979, %v985
        %v987 = vcombine.low %v961, %v962
        %v989 = vunpack.c.l.s4 1983009808
        %v990 = vunpack.c.0.s8 %v989
        %v991 = vlaneseq
        %v992 = vshrl.u32 %v991, 7
        %v993 = vsub.s32 %v990, %v992
        %v994 = vrot.slane %v987, %v993
        %v995 = vcombine.low %v970, %v978
        %v996 = vcombine.high %v970, %v978
        %v998 = vunpack.c.l.s4 1934713408
        %v999 = vunpack.c.0.s8 %v998
        %v1000 = vlaneseq
        %v1001 = vshrl.u32 %v1000, 7
        %v1002 = vsub.s32 %v999, %v1001
        %v1003 = vrot.slane %v995, %v1002
        %v1005 = vunpack.c.l.s4 1934713408
        %v1006 = vunpack.c.0.s8 %v1005
        %v1007 = vlaneseq
        %v1008 = vshrl.u32 %v1007, 7
        %v1009 = vsub.s32 %v1006, %v1008
        %v1010 = vrot.slane %v996, %v1009
        %v1011 = vcombine.low %v986, %v994
        %v1012 = vcombine.high %v986, %v994
        %v1014 = vunpack.c.l.s4 1934713408
        %v1015 = vunpack.c.0.s8 %v1014
        %v1016 = vlaneseq
        %v1017 = vshrl.u32 %v1016, 7
        %v1018 = vsub.s32 %v1015, %v1017
        %v1019 = vrot.slane %v1011, %v1018
        %v1021 = vunpack.c.l.s4 1934713408
        %v1022 = vunpack.c.0.s8 %v1021
        %v1023 = vlaneseq
        %v1024 = vshrl.u32 %v1023, 7
        %v1025 = vsub.s32 %v1022, %v1024
        %v1026 = vrot.slane %v1012, %v1025
        %v1027 = vcombine.low %v1003, %v1019
        %v1028 = vcombine.high %v1003, %v1019
        %v1029 = vcombine.low %v1010, %v1026
        %v1030 = vcombine.high %v1010, %v1026
        %1031 = vst.msk [vmem:[%s554] sm:$0xff] %vm795, %v1027
        %1032 = vst.msk [vmem:[%s554 + $0x8] sm:$0xff] %vm795, %v1028
        %1033 = vst.msk [vmem:[%s554 + $0x10] sm:$0xff] %vm795, %v1029
        %1034 = vst.msk [vmem:[%s554 + $0x18] sm:$0xff] %vm795, %v1030
        %v1035 = vld [vmem:[%s491] sm:$0xff]
        %v1036 = vld [vmem:[#allocation11] sm:$0xff]
        %v1037 = vld [vmem:[#allocation11 + $0x8] sm:$0xff]
        %v1038 = vld [vmem:[#allocation11 + $0x10] sm:$0xff]
        %v1039 = vld [vmem:[#allocation11 + $0x18] sm:$0xff]
        %v1040 = vld [vmem:[%s8] sm:$0x1]
        %v1042 = vlaneseq
        %v1043 = vshrl.u32 %v1042, 7
        %v1044 = vsub.s32 0, %v1043
        %v1045 = vrot.slane %v1040, %v1044
        %v1048 = vsel %vm574, %v1035, 0
        %1050 = vmatprep.subr.mxu0 0.0
        %1051 = vmatpush1.msra.mxu0 %v1036
        %1052 = vmatprep.subr.mxu0 0.0
        %1053 = vmatpush1.msra.mxu0 %v1037
        %1054 = vmatprep.subr.mxu0 0.0
        %1055 = vmatpush1.msra.mxu0 %v1038
        %1056 = vmatprep.subr.mxu0 0.0
        %1057 = vmatpush1.msra.mxu0 %v1039
        %1058 = vmatprep.subr.mxu0 0.0
        %1059 = vmatpush1.msra.mxu0 0.0
        %1060 = vmatprep.subr.mxu0 0.0
        %1061 = vmatpush1.msra.mxu0 0.0
        %1062 = vmatprep.subr.mxu0 0.0
        %1063 = vmatpush1.msra.mxu0 0.0
        %1064 = vmatprep.subr.mxu0 0.0
        %1065 = vmatpush1.msra.mxu0 0.0
        %1066 = vmatprep.subr.mxu0 0.0
        %1067 = vmatpush1.msra.mxu0 0.0
        %1068 = vmatprep.subr.mxu0 0.0
        %1069 = vmatpush1.msra.mxu0 0.0
        %1070 = vmatprep.subr.mxu0 0.0
        %1071 = vmatpush1.msra.mxu0 0.0
        %1072 = vmatprep.subr.mxu0 0.0
        %1073 = vmatpush1.msra.mxu0 0.0
        %1074 = vmatprep.subr.mxu0 0.0
        %1075 = vmatpush1.msra.mxu0 0.0
        %1076 = vmatprep.subr.mxu0 0.0
        %1077 = vmatpush1.msra.mxu0 0.0
        %1078 = vmatprep.subr.mxu0 0.0
        %1079 = vmatpush1.msra.mxu0 0.0
        %1080 = vmatprep.subr.mxu0 0.0
        %1081 = vmatpush1.msra.mxu0 0.0
        %1082 = vmatprep.subr.mxu0 0.0
        %1083 = vmatpush1.msra.mxu0 0.0
        %1084 = vmatprep.subr.mxu0 0.0
        %1085 = vmatpush1.msra.mxu0 0.0
        %1086 = vmatprep.subr.mxu0 0.0
        %1087 = vmatpush1.msra.mxu0 0.0
        %1088 = vmatprep.subr.mxu0 0.0
        %1089 = vmatpush1.msra.mxu0 0.0
        %1090 = vmatprep.subr.mxu0 0.0
        %1091 = vmatpush1.msra.mxu0 0.0
        %1092 = vmatprep.subr.mxu0 0.0
        %1093 = vmatpush1.msra.mxu0 0.0
        %1094 = vmatprep.subr.mxu0 0.0
        %1095 = vmatpush1.msra.mxu0 0.0
        %1096 = vmatprep.subr.mxu0 0.0
        %1097 = vmatpush1.msra.mxu0 0.0
        %1098 = vmatprep.subr.mxu0 0.0
        %1099 = vmatpush1.msra.mxu0 0.0
        %1100 = vmatprep.subr.mxu0 0.0
        %1101 = vmatpush1.msra.mxu0 0.0
        %1102 = vmatprep.subr.mxu0 0.0
        %1103 = vmatpush1.msra.mxu0 0.0
        %1104 = vmatprep.subr.mxu0 0.0
        %1105 = vmatpush1.msra.mxu0 0.0
        %1106 = vmatprep.subr.mxu0 0.0
        %1107 = vmatpush1.msra.mxu0 0.0
        %1108 = vmatprep.subr.mxu0 0.0
        %1109 = vmatpush1.msra.mxu0 0.0
        %1110 = vmatprep.subr.mxu0 0.0
        %1111 = vmatpush1.msra.mxu0 0.0
        %1112 = vmatprep.subr.mxu0 0.0
        %1113 = vmatpush1.msra.mxu0 0.0
        %1114 = vmatprep.mubr.f32.mxu0 0.0
        %1115 = vmatmul.mubr.f32.gmra.mrb[0].mxu0 %v1048
        %v1116 = vpop.f32.mrb[0].mxu0
        %v1117 = vadd.f32 %v1045, %v1116
        %v1118 = vpop.f32.mrb[0].mxu0
        %1119 = vdwg.mxu0
        %1121 = vrot.lane.b32.xlu0 %v1117, 120
        %v1122 = vpop.permute.xlu0 %1121
        %1124 = vrot.lane.b32.xlu0 %v1117, 112
        %v1125 = vpop.permute.xlu0 %1124
        %1127 = vrot.lane.b32.xlu0 %v1117, 104
        %v1128 = vpop.permute.xlu0 %1127
        %v1130 = vcombine.low %v1117, %v1125
        %v1131 = vcombine.high %v1117, %v1125
        %v1133 = vunpack.c.l.s4 1983009808
        %v1134 = vunpack.c.0.s8 %v1133
        %v1135 = vlaneseq
        %v1136 = vshrl.u32 %v1135, 7
        %v1137 = vsub.s32 %v1134, %v1136
        %v1138 = vrot.slane %v1130, %v1137
        %v1140 = vunpack.c.l.s4 1983009808
        %v1141 = vunpack.c.0.s8 %v1140
        %v1142 = vlaneseq
        %v1143 = vshrl.u32 %v1142, 7
        %v1144 = vsub.s32 %v1141, %v1143
        %v1145 = vrot.slane %v1131, %v1144
        %v1146 = vcombine.low %v1122, %v1128
        %v1147 = vcombine.high %v1122, %v1128
        %v1149 = vunpack.c.l.s4 1983009808
        %v1150 = vunpack.c.0.s8 %v1149
        %v1151 = vlaneseq
        %v1152 = vshrl.u32 %v1151, 7
        %v1153 = vsub.s32 %v1150, %v1152
        %v1154 = vrot.slane %v1146, %v1153
        %v1156 = vunpack.c.l.s4 1983009808
        %v1157 = vunpack.c.0.s8 %v1156
        %v1158 = vlaneseq
        %v1159 = vshrl.u32 %v1158, 7
        %v1160 = vsub.s32 %v1157, %v1159
        %v1161 = vrot.slane %v1147, %v1160
        %v1162 = vcombine.low %v1138, %v1154
        %v1163 = vcombine.high %v1138, %v1154
        %v1165 = vunpack.c.l.s4 1934713408
        %v1166 = vunpack.c.0.s8 %v1165
        %v1167 = vlaneseq
        %v1168 = vshrl.u32 %v1167, 7
        %v1169 = vsub.s32 %v1166, %v1168
        %v1170 = vrot.slane %v1162, %v1169
        %v1172 = vunpack.c.l.s4 1934713408
        %v1173 = vunpack.c.0.s8 %v1172
        %v1174 = vlaneseq
        %v1175 = vshrl.u32 %v1174, 7
        %v1176 = vsub.s32 %v1173, %v1175
        %v1177 = vrot.slane %v1163, %v1176
        %v1178 = vcombine.low %v1145, %v1161
        %v1179 = vcombine.high %v1145, %v1161
        %v1181 = vunpack.c.l.s4 1934713408
        %v1182 = vunpack.c.0.s8 %v1181
        %v1183 = vlaneseq
        %v1184 = vshrl.u32 %v1183, 7
        %v1185 = vsub.s32 %v1182, %v1184
        %v1186 = vrot.slane %v1178, %v1185
        %v1188 = vunpack.c.l.s4 1934713408
        %v1189 = vunpack.c.0.s8 %v1188
        %v1190 = vlaneseq
        %v1191 = vshrl.u32 %v1190, 7
        %v1192 = vsub.s32 %v1189, %v1191
        %v1193 = vrot.slane %v1179, %v1192
        %v1194 = vcombine.high %v1170, 0.0
        %v1195 = vcombine.high %v1177, 0.0
        %v1196 = vcombine.high %v1186, 0.0
        %v1197 = vcombine.high %v1193, 0.0
        %v1198 = vcombine.low %v1170, %v1177
        %v1200 = vunpack.c.l.s4 1983009808
        %v1201 = vunpack.c.0.s8 %v1200
        %v1202 = vlaneseq
        %v1203 = vshrl.u32 %v1202, 7
        %v1204 = vsub.s32 %v1201, %v1203
        %v1205 = vrot.slane %v1198, %v1204
        %v1206 = vcombine.low %v1194, %v1195
        %v1208 = vunpack.c.l.s4 1983009808
        %v1209 = vunpack.c.0.s8 %v1208
        %v1210 = vlaneseq
        %v1211 = vshrl.u32 %v1210, 7
        %v1212 = vsub.s32 %v1209, %v1211
        %v1213 = vrot.slane %v1206, %v1212
        %v1214 = vcombine.low %v1186, %v1193
        %v1216 = vunpack.c.l.s4 1983009808
        %v1217 = vunpack.c.0.s8 %v1216
        %v1218 = vlaneseq
        %v1219 = vshrl.u32 %v1218, 7
        %v1220 = vsub.s32 %v1217, %v1219
        %v1221 = vrot.slane %v1214, %v1220
        %v1222 = vcombine.low %v1196, %v1197
        %v1224 = vunpack.c.l.s4 1983009808
        %v1225 = vunpack.c.0.s8 %v1224
        %v1226 = vlaneseq
        %v1227 = vshrl.u32 %v1226, 7
        %v1228 = vsub.s32 %v1225, %v1227
        %v1229 = vrot.slane %v1222, %v1228
        %v1230 = vcombine.low %v1205, %v1213
        %v1231 = vcombine.high %v1205, %v1213
        %v1233 = vunpack.c.l.s4 1934713408
        %v1234 = vunpack.c.0.s8 %v1233
        %v1235 = vlaneseq
        %v1236 = vshrl.u32 %v1235, 7
        %v1237 = vsub.s32 %v1234, %v1236
        %v1238 = vrot.slane %v1230, %v1237
        %v1240 = vunpack.c.l.s4 1934713408
        %v1241 = vunpack.c.0.s8 %v1240
        %v1242 = vlaneseq
        %v1243 = vshrl.u32 %v1242, 7
        %v1244 = vsub.s32 %v1241, %v1243
        %v1245 = vrot.slane %v1231, %v1244
        %v1246 = vcombine.low %v1221, %v1229
        %v1247 = vcombine.high %v1221, %v1229
        %v1249 = vunpack.c.l.s4 1934713408
        %v1250 = vunpack.c.0.s8 %v1249
        %v1251 = vlaneseq
        %v1252 = vshrl.u32 %v1251, 7
        %v1253 = vsub.s32 %v1250, %v1252
        %v1254 = vrot.slane %v1246, %v1253
        %v1256 = vunpack.c.l.s4 1934713408
        %v1257 = vunpack.c.0.s8 %v1256
        %v1258 = vlaneseq
        %v1259 = vshrl.u32 %v1258, 7
        %v1260 = vsub.s32 %v1257, %v1259
        %v1261 = vrot.slane %v1247, %v1260
        %v1262 = vcombine.low %v1238, %v1254
        %v1263 = vcombine.high %v1238, %v1254
        %v1264 = vcombine.low %v1245, %v1261
        %v1265 = vcombine.high %v1245, %v1261
        %1266 = vst.msk [vmem:[%s561] sm:$0xff] %vm795, %v1262
        %1267 = vst.msk [vmem:[%s561 + $0x8] sm:$0xff] %vm795, %v1263
        %1268 = vst.msk [vmem:[%s561 + $0x10] sm:$0xff] %vm795, %v1264
        %1269 = vst.msk [vmem:[%s561 + $0x18] sm:$0xff] %vm795, %v1265
        %s1270 = sand.u32 %s269, 1
        %s1271 = scalar_lea.sflag [#allocation4], %s1270
        %s1272 = sand.u32 %s269, 1
        %s1273 = smul.addr %s1272, 32
        %s1274 = scalar_lea.vmem [#allocation13], %s1273
        %s1275 = sand.u32 %s37, 1
        %s1276 = scalar_lea.sflag [#allocation15], %s1275
        %s1277 = sand.u32 %s297, 1
        %s1278 = smul.addr %s1277, 32
        %s1279 = scalar_lea.vmem [#allocation14], %s1278
        %s1280 = sand.u32 %s37, 1
        %s1281 = scalar_lea.sflag [#allocation15], %s1280
        %s1282 = sand.u32 %s325, 1
        %s1283 = smul.addr %s1282, 32
        %s1284 = scalar_lea.vmem [#allocation16], %s1283
        // Predicated region
        $region81: #{tpu_custom_call.1} parent=55 // pred_check
          %p1285 = pneg %p279
        $region82: #{tpu_custom_call.1} parent=55 // pred_check_branch
          %1287 = sbr.rel (%p1285) target = $region84
        $region83: #{tpu_custom_call.1} parent=55 // pred_region
          %s1289 = ssub.s32 512, 512
          %1290 = vsyncadd %s1271, %s1289
          %s1291 = smul.addr %s41, 4
          %s1292 = sadd.s32 %s42, %s1291
          %s1293 = smul.addr %s1292, 128
          %s1294 = scalar_lea.hbm %s9, %s1293
          %s1295 = sshll.u32 %s1274, 4
          %s1296 = int_to_ptr.vmem [resolvable:$true] %s1295
          %1301 = dma.vmem_to_hbm [thread:$0]  %s1296, 512, %s1294, %s1271, 128, 128, 8
        $region84: #{tpu_custom_call.1} parent=55 // pred_fallthru
          _
        // Predicated region
        $region85: #{tpu_custom_call.1} parent=55 // pred_check
          %p1302 = pneg %p307
        $region86: #{tpu_custom_call.1} parent=55 // pred_check_branch
          %1304 = sbr.rel (%p1302) target = $region88
        $region87: #{tpu_custom_call.1} parent=55 // pred_region
          %s1306 = ssub.s32 512, 512
          %1307 = vsyncadd %s1276, %s1306
          %s1308 = smul.addr %s41, 4
          %s1309 = sadd.s32 %s42, %s1308
          %s1310 = smul.addr %s1309, 128
          %s1311 = scalar_lea.hbm %s10, %s1310
          %s1312 = sshll.u32 %s1279, 4
          %s1313 = int_to_ptr.vmem [resolvable:$true] %s1312
          %1318 = dma.vmem_to_hbm [thread:$0]  %s1313, 512, %s1311, %s1276, 128, 128, 8
        $region88: #{tpu_custom_call.1} parent=55 // pred_fallthru
          _
        // Predicated region
        $region89: #{tpu_custom_call.1} parent=55 // pred_check
          %p1319 = pneg %p335
        $region90: #{tpu_custom_call.1} parent=55 // pred_check_branch
          %1321 = sbr.rel (%p1319) target = $region92
        $region91: #{tpu_custom_call.1} parent=55 // pred_region
          %s1323 = ssub.s32 512, 512
          %1324 = vsyncadd %s1281, %s1323
          %s1325 = smul.addr %s41, 4
          %s1326 = sadd.s32 %s42, %s1325
          %s1327 = smul.addr %s1326, 128
          %s1328 = scalar_lea.hbm %s11, %s1327
          %s1329 = sshll.u32 %s1284, 4
          %s1330 = int_to_ptr.vmem [resolvable:$true] %s1329
          %1335 = dma.vmem_to_hbm [thread:$0]  %s1330, 512, %s1328, %s1281, 128, 128, 8
        $region92: #{tpu_custom_call.1} parent=55 // pred_fallthru
          _
      $region56: #{tpu_custom_call.1} parent=5 // pred_fallthru
        _
      %p1336 = scmp.le.s32.totalorder 2, %s32
      // Predicated region
      $region93: #{tpu_custom_call.1} parent=5 // pred_check
        %p1337 = pneg %p1336
      $region94: #{tpu_custom_call.1} parent=5 // pred_check_branch
        %1339 = sbr.rel (%p1337) target = $region96
      $region95: #{tpu_custom_call.1} parent=5 // pred_region
        %s1340 = ssub.s32 %s32, 2
        // Predicated region
        $region97: #{tpu_custom_call.1} parent=95 // pred_check
          %p1341 = pneg %p285
        $region98: #{tpu_custom_call.1} parent=95 // pred_check_branch
          %1343 = sbr.rel (%p1341) target = $region100
        $region99: #{tpu_custom_call.1} parent=95 // pred_region
          %s1344 = sand.u32 %s270, 1
          %s1345 = scalar_lea.sflag [#allocation4], %s1344
          %s1346 = sand.u32 %s270, 1
          %s1347 = smul.addr %s1346, 32
          %s1348 = scalar_lea.vmem [#allocation13], %s1347
          %1349 = dma.done %s1345, 512
        $region100: #{tpu_custom_call.1} parent=95 // pred_fallthru
          _
        // Predicated region
        $region101: #{tpu_custom_call.1} parent=95 // pred_check
          %p1350 = pneg %p313
        $region102: #{tpu_custom_call.1} parent=95 // pred_check_branch
          %1352 = sbr.rel (%p1350) target = $region104
        $region103: #{tpu_custom_call.1} parent=95 // pred_region
          %s1353 = sand.u32 %s38, 1
          %s1354 = scalar_lea.sflag [#allocation15], %s1353
          %s1355 = sand.u32 %s298, 1
          %s1356 = smul.addr %s1355, 32
          %s1357 = scalar_lea.vmem [#allocation14], %s1356
          %1358 = dma.done %s1354, 512
        $region104: #{tpu_custom_call.1} parent=95 // pred_fallthru
          _
        // Predicated region
        $region105: #{tpu_custom_call.1} parent=95 // pred_check
          %p1359 = pneg %p341
        $region106: #{tpu_custom_call.1} parent=95 // pred_check_branch
          %1361 = sbr.rel (%p1359) target = $region108
        $region107: #{tpu_custom_call.1} parent=95 // pred_region
          %s1362 = sand.u32 %s38, 1
          %s1363 = scalar_lea.sflag [#allocation15], %s1362
          %s1364 = sand.u32 %s326, 1
          %s1365 = smul.addr %s1364, 32
          %s1366 = scalar_lea.vmem [#allocation16], %s1365
          %1367 = dma.done %s1363, 512
        $region108: #{tpu_custom_call.1} parent=95 // pred_fallthru
          _
      $region96: #{tpu_custom_call.1} parent=5 // pred_fallthru
        _
    $region6: #{tpu_custom_call.1} parent=1 // loop_footer
      %s36 = sadd.s32 1, %s32
    $region7: #{tpu_custom_call.1} parent=1 // loop_footer_branch
      %31 = sbr.rel target = $region3
    $region8: #{tpu_custom_call.1} parent=1 // loop_exit
      _
    %1368 = vsyncpa [#allocation3], 1
    %s1369 = scalar_lea.sflag [#allocation3], 1
    %1370 = vsyncpa %s1369, 1
    %1371 = vsyncpa [#allocation6], 1
    %s1372 = scalar_lea.sflag [#allocation6], 1
    %1373 = vsyncpa %s1372, 1
    %1374 = vsyncpa [#allocation9], 1
    %1375 = vsyncpa [#allocation12], 1
    %1376 = vsyncpa [#allocation4], 1
    %s1377 = scalar_lea.sflag [#allocation4], 1
    %1378 = vsyncpa %s1377, 1
    %1379 = vsyncpa [#allocation15], 1
    %s1380 = scalar_lea.sflag [#allocation15], 1
    %1381 = vsyncpa %s1380, 1

</llo_original>
